<compile_context>
chip_gen: v7x
topology: tpu7x:2x2x1
jax: 0.10.0
libtpu: 0.0.40
codegen_flags: <defaults>
</compile_context>

<pallas_src>
import functools

import jax
import jax.numpy as jnp
from jax.experimental import pallas as pl
from jax.experimental.pallas import tpu as pltpu

BN_EPS = 1e-5          # nn.BatchNorm1d default eps
NORM_EPS = 1e-12       # F.normalize default eps
TEMPERATURE = 0.07     # ContrastiveLoss default temperature


def _vmem():
    return pl.BlockSpec(memory_space=pltpu.MemorySpace.VMEM)


def _smem():
    return pl.BlockSpec(memory_space=pltpu.MemorySpace.SMEM)


# --------------------------- fused SimCLR kernel ---------------------------
def simclr_fused_kernel(x1_ref, x2_ref, ew_ref, eb_ref, w1_ref, b1_ref, g_ref,
                        be_ref, w2_ref, b2_ref, feat_ref, rep_ref, loss_ref, *,
                        per_view_batch, temperature):
    B = per_view_batch
    f32 = jnp.float32
    bf16 = jnp.bfloat16

    # Hoist weight/param loads once; reused for both views.
    ew = ew_ref[...]      # [C*H*W, ENC_DIM] bf16, GAP pre-folded (rows = ew[c]/HW)
    eb = eb_ref[...]      # [1, ENC_DIM] f32
    w1 = w1_ref[...]      # [ENC_DIM, HIDDEN] bf16
    b1 = b1_ref[...]      # [1, HIDDEN] f32
    g = g_ref[...]        # [1, HIDDEN] f32  (BN gamma)
    be = be_ref[...]      # [1, HIDDEN] f32  (BN beta)
    w2 = w2_ref[...]      # [HIDDEN, PROJ] bf16
    b2 = b2_ref[...]      # [1, PROJ] f32

    def encode_project(x_f32):
        # ---- encoder stand-in: GAP folded into the MXU contraction ----
        h = jnp.dot(x_f32.astype(bf16), ew, preferred_element_type=f32) + eb   # [B, ENC]
        # ---- projection head: Linear -> BatchNorm1d(train, this view) -> ReLU -> Linear
        pre = jnp.dot(h.astype(bf16), w1, preferred_element_type=f32) + b1     # [B, HID]
        mu = jnp.mean(pre, axis=0, keepdims=True)
        var = jnp.mean((pre - mu) ** 2, axis=0, keepdims=True)   # biased var (PyTorch train)
        r = jnp.maximum((pre - mu) * jax.lax.rsqrt(var + BN_EPS) * g + be, 0.0)
        z = jnp.dot(r.astype(bf16), w2, preferred_element_type=f32) + b2       # [B, PROJ]
        # ---- F.normalize(dim=1), f32 ----
        ss = jnp.sum(z * z, axis=-1, keepdims=True)
        zn = z * jax.lax.rsqrt(jnp.maximum(ss, NORM_EPS * NORM_EPS))
        return h, zn

    h1, zn1 = encode_project(x1_ref[...])
    h2, zn2 = encode_project(x2_ref[...])

    # Write each view's half directly (static, tile-aligned slices; no concat).
    rep_ref[0:B, :] = h1
    rep_ref[B:2 * B, :] = h2
    feat_ref[0:B, :] = zn1
    feat_ref[B:2 * B, :] = zn2

    # ---- ContrastiveLoss (as written in the PyTorch module) ----
    n = 2 * B
    zn = feat_ref[...].astype(bf16)          # re-read stacked [2B, P] from VMEM (no copy op)
    # sim = zn @ zn.T / T ; contract last dims directly, no explicit transpose.
    # TODO(synk): at large 2B, verify via pl.lower_as_mlir that no XLU vxpose of zn is emitted.
    sim = jax.lax.dot_general(zn, zn, (((1,), (1,)), ((), ())),
                              preferred_element_type=f32) * (1.0 / temperature)
    row = jax.lax.broadcasted_iota(jnp.int32, (n, n), 0)
    col = jax.lax.broadcasted_iota(jnp.int32, (n, n), 1)
    # labels = sorted(arange(n//2).repeat(2)) => labels[i] = i // 2; with the
    # diagonal removed, the positive of row i is exactly column i ^ 1.
    mask = jnp.where(col == jnp.bitwise_xor(row, 1), 1.0, 0.0)
    logits = sim - jnp.max(sim, axis=1, keepdims=True)
    log_prob = logits - jnp.log(jnp.sum(jnp.exp(logits), axis=1, keepdims=True))
    mean_log_prob_pos = (jnp.sum(mask * log_prob, axis=1, keepdims=True)
                         / jnp.sum(mask, axis=1, keepdims=True))               # [2B, 1]
    loss_ref[0] = -jnp.sum(mean_log_prob_pos) / n                              # scalar -> SMEM


def simclr_forward(params, x1, x2, temperature=TEMPERATURE):
    ew, eb = params["encoder"]
    w1, b1, g, be, w2, b2 = params["projection_head"]
    B, C, H, W = x1.shape
    assert x2.shape == x1.shape
    # Half-writes rep_ref[:B]/[B:] must stay (8,128)-tile aligned for f32.
    assert B % 8 == 0, "per-view batch must be a multiple of 8"
    hw = H * W
    enc_dim = ew.shape[1]
    hidden = w1.shape[1]
    proj = w2.shape[1]

    # Fold GAP into the encoder matmul: one contraction with K = C*H*W.
    # (In real training, build ew_tiled and the bf16 weight casts once at init.)
    ew_tiled = (jnp.repeat(ew, hw, axis=0) * (1.0 / hw)).astype(jnp.bfloat16)

    kernel = functools.partial(simclr_fused_kernel,
                               per_view_batch=B,
                               temperature=float(temperature))
    features, reps, loss = pl.pallas_call(
        kernel,
        out_shape=(
            jax.ShapeDtypeStruct((2 * B, proj), jnp.float32),     # features
            jax.ShapeDtypeStruct((2 * B, enc_dim), jnp.float32),  # representations
            jax.ShapeDtypeStruct((1,), jnp.float32),              # loss (SMEM scalar)
        ),
        in_specs=[_vmem()] * 10,
        out_specs=(_vmem(), _vmem(), _smem()),
    )(x1.reshape(B, C * hw), x2.reshape(B, C * hw),            # free row-major reshapes
      ew_tiled, eb.reshape(1, enc_dim),
      w1.astype(jnp.bfloat16), b1.reshape(1, hidden),
      g.reshape(1, hidden), be.reshape(1, hidden),
      w2.astype(jnp.bfloat16), b2.reshape(1, proj))

    return {"loss": loss[0], "features": features, "representations": reps}


# --------------------------- parameter initialization ---------------------------
def init_linear(key, din, dout):
    kw, kb = jax.random.split(key)
    lim = 1.0 / jnp.sqrt(jnp.float32(din))
    w = jax.random.uniform(kw, (din, dout), jnp.float32, -lim, lim)
    b = jax.random.uniform(kb, (dout,), jnp.float32, -lim, lim)
    return w, b


def init_projection_head(key, din, hidden, dout):
    k1, k2 = jax.random.split(key)
    w1, b1 = init_linear(k1, din, hidden)
    gamma = jnp.ones((hidden,), jnp.float32)   # BN affine init
    beta = jnp.zeros((hidden,), jnp.float32)
    w2, b2 = init_linear(k2, hidden, dout)
    return (w1, b1, gamma, beta, w2, b2)


# --------------------------- pure-JAX f32 reference ---------------------------
def _ref_forward(params, x1, x2, temperature=TEMPERATURE):
    ew, eb = params["encoder"]
    w1, b1, g, be, w2, b2 = params["projection_head"]

    def enc(x):
        return x.mean(axis=(2, 3)) @ ew + eb

    def head(h):
        z = h @ w1 + b1
        mu = z.mean(0, keepdims=True)
        var = ((z - mu) ** 2).mean(0, keepdims=True)
        zn = (z - mu) * jax.lax.rsqrt(var + BN_EPS) * g + be
        return jnp.maximum(zn, 0.0) @ w2 + b2

    def l2norm(z):
        ss = jnp.sum(z * z, axis=1, keepdims=True)
        return z * jax.lax.rsqrt(jnp.maximum(ss, NORM_EPS * NORM_EPS))

    h1, h2 = enc(x1), enc(x2)
    z1, z2 = l2norm(head(h1)), l2norm(head(h2))
    feats = jnp.concatenate([z1, z2], axis=0)
    n = feats.shape[0]
    labels = jnp.arange(n) // 2
    mask = (labels[:, None] == labels[None, :]).astype(jnp.float32)
    mask = mask * (1.0 - jnp.eye(n, dtype=jnp.float32))
    sim = feats @ feats.T / temperature
    logits = sim - sim.max(axis=1, keepdims=True)
    log_prob = logits - jnp.log(jnp.exp(logits).sum(axis=1, keepdims=True))
    mean_log_prob_pos = (mask * log_prob).sum(1) / mask.sum(1)
    loss = -mean_log_prob_pos.mean()
    return {"loss": loss, "features": feats,
            "representations": jnp.concatenate([h1, h2], axis=0)}


if __name__ == "__main__":
    key = jax.random.PRNGKey(0)
    B, C, H, W = 8, 3, 16, 16               # small NCHW views, 3 channels as SimCLR expects
    ENC_DIM, HIDDEN, PROJ = 128, 256, 128   # lane-dense (multiples of 128)

    k_x1, k_x2, k_enc, k_head = jax.random.split(key, 4)
    x1 = jax.random.normal(k_x1, (B, C, H, W), jnp.float32)
    x2 = jax.random.normal(k_x2, (B, C, H, W), jnp.float32)

    params = {
        "encoder": init_linear(k_enc, C, ENC_DIM),
        "projection_head": init_projection_head(k_head, ENC_DIM, HIDDEN, PROJ),
    }

    out = simclr_forward(params, x1, x2)
    jax.block_until_ready(out)

    ref = _ref_forward(params, x1, x2)
    # bf16 MXU operands vs f32 reference -> loosened tolerances (see header).
    assert jnp.allclose(out["loss"], ref["loss"], rtol=3e-2, atol=3e-2)
    assert jnp.allclose(out["features"], ref["features"], rtol=2e-2, atol=2e-2)
    assert jnp.allclose(out["representations"], ref["representations"], rtol=2e-2, atol=2e-2)

    print("KERNEL_OK")
</pallas_src>

<mosaic_0001>
module attributes {stable_mosaic.version = 11 : i64} {
  func.func @simclr_fused_kernel(%arg0: memref<8x768xf32, #tpu.memory_space<vmem>>, %arg1: memref<8x768xf32, #tpu.memory_space<vmem>>, %arg2: memref<768x128xbf16, #tpu.memory_space<vmem>>, %arg3: memref<1x128xf32, #tpu.memory_space<vmem>>, %arg4: memref<128x256xbf16, #tpu.memory_space<vmem>>, %arg5: memref<1x256xf32, #tpu.memory_space<vmem>>, %arg6: memref<1x256xf32, #tpu.memory_space<vmem>>, %arg7: memref<1x256xf32, #tpu.memory_space<vmem>>, %arg8: memref<256x128xbf16, #tpu.memory_space<vmem>>, %arg9: memref<1x128xf32, #tpu.memory_space<vmem>>, %arg10: memref<16x128xf32, #tpu.memory_space<vmem>>, %arg11: memref<16x128xf32, #tpu.memory_space<vmem>>, %arg12: memref<1xf32, #tpu.memory_space<smem>>) attributes {dimension_semantics = [], scalar_prefetch = 0 : i64, scratch_operands = 0 : i64, tpu.core_type = #tpu.core_type<tc>} {
    %c0 = arith.constant 0 : index
    %c0_0 = arith.constant 0 : index
    %0 = vector.load %arg2[%c0, %c0_0] : memref<768x128xbf16, #tpu.memory_space<vmem>>, vector<768x128xbf16>
    %c0_1 = arith.constant 0 : index
    %c0_2 = arith.constant 0 : index
    %1 = vector.load %arg3[%c0_1, %c0_2] : memref<1x128xf32, #tpu.memory_space<vmem>>, vector<1x128xf32>
    %c0_3 = arith.constant 0 : index
    %c0_4 = arith.constant 0 : index
    %2 = vector.load %arg4[%c0_3, %c0_4] : memref<128x256xbf16, #tpu.memory_space<vmem>>, vector<128x256xbf16>
    %c0_5 = arith.constant 0 : index
    %c0_6 = arith.constant 0 : index
    %3 = vector.load %arg5[%c0_5, %c0_6] : memref<1x256xf32, #tpu.memory_space<vmem>>, vector<1x256xf32>
    %c0_7 = arith.constant 0 : index
    %c0_8 = arith.constant 0 : index
    %4 = vector.load %arg6[%c0_7, %c0_8] : memref<1x256xf32, #tpu.memory_space<vmem>>, vector<1x256xf32>
    %c0_9 = arith.constant 0 : index
    %c0_10 = arith.constant 0 : index
    %5 = vector.load %arg7[%c0_9, %c0_10] : memref<1x256xf32, #tpu.memory_space<vmem>>, vector<1x256xf32>
    %c0_11 = arith.constant 0 : index
    %c0_12 = arith.constant 0 : index
    %6 = vector.load %arg8[%c0_11, %c0_12] : memref<256x128xbf16, #tpu.memory_space<vmem>>, vector<256x128xbf16>
    %c0_13 = arith.constant 0 : index
    %c0_14 = arith.constant 0 : index
    %7 = vector.load %arg9[%c0_13, %c0_14] : memref<1x128xf32, #tpu.memory_space<vmem>>, vector<1x128xf32>
    %c0_15 = arith.constant 0 : index
    %c0_16 = arith.constant 0 : index
    %8 = vector.load %arg0[%c0_15, %c0_16] : memref<8x768xf32, #tpu.memory_space<vmem>>, vector<8x768xf32>
    %9 = arith.truncf %8 : vector<8x768xf32> to vector<8x768xbf16>
    %cst = arith.constant dense<0.000000e+00> : vector<8x128xf32>
    %10 = tpu.matmul %9, %0, %cst {dimension_numbers = #tpu.dot_dimension_numbers<[1], [0], [0], [1], [0, 0, 1, 1], [], []>} : vector<8x768xbf16>, vector<768x128xbf16>, vector<8x128xf32> -> vector<8x128xf32>
    %11 = vector.broadcast %1 : vector<1x128xf32> to vector<8x128xf32>
    %12 = arith.addf %10, %11 : vector<8x128xf32>
    %13 = arith.truncf %12 : vector<8x128xf32> to vector<8x128xbf16>
    %cst_17 = arith.constant dense<0.000000e+00> : vector<8x256xf32>
    %14 = tpu.matmul %13, %2, %cst_17 {dimension_numbers = #tpu.dot_dimension_numbers<[1], [0], [0], [1], [0, 0, 1, 1], [], []>} : vector<8x128xbf16>, vector<128x256xbf16>, vector<8x256xf32> -> vector<8x256xf32>
    %15 = vector.broadcast %3 : vector<1x256xf32> to vector<8x256xf32>
    %16 = arith.addf %14, %15 : vector<8x256xf32>
    %cst_18 = arith.constant dense<0.000000e+00> : vector<256xf32>
    %17 = vector.multi_reduction <add>, %16, %cst_18 [0] : vector<8x256xf32> to vector<256xf32>
    %18 = vector.shape_cast %17 : vector<256xf32> to vector<1x256xf32>
    %cst_19 = arith.constant 8.000000e+00 : f32
    %19 = vector.broadcast %cst_19 : f32 to vector<1x256xf32>
    %20 = arith.divf %18, %19 : vector<1x256xf32>
    %21 = vector.broadcast %20 : vector<1x256xf32> to vector<8x256xf32>
    %22 = arith.subf %16, %21 : vector<8x256xf32>
    %23 = arith.mulf %22, %22 : vector<8x256xf32>
    %cst_20 = arith.constant dense<0.000000e+00> : vector<256xf32>
    %24 = vector.multi_reduction <add>, %23, %cst_20 [0] : vector<8x256xf32> to vector<256xf32>
    %25 = vector.shape_cast %24 : vector<256xf32> to vector<1x256xf32>
    %cst_21 = arith.constant 8.000000e+00 : f32
    %26 = vector.broadcast %cst_21 : f32 to vector<1x256xf32>
    %27 = arith.divf %25, %26 : vector<1x256xf32>
    %28 = vector.broadcast %20 : vector<1x256xf32> to vector<8x256xf32>
    %29 = arith.subf %16, %28 : vector<8x256xf32>
    %cst_22 = arith.constant 9.99999974E-6 : f32
    %30 = vector.broadcast %cst_22 : f32 to vector<1x256xf32>
    %31 = arith.addf %27, %30 : vector<1x256xf32>
    %32 = math.rsqrt %31 : vector<1x256xf32>
    %33 = vector.broadcast %32 : vector<1x256xf32> to vector<8x256xf32>
    %34 = arith.mulf %29, %33 : vector<8x256xf32>
    %35 = vector.broadcast %4 : vector<1x256xf32> to vector<8x256xf32>
    %36 = arith.mulf %34, %35 : vector<8x256xf32>
    %37 = vector.broadcast %5 : vector<1x256xf32> to vector<8x256xf32>
    %38 = arith.addf %36, %37 : vector<8x256xf32>
    %cst_23 = arith.constant 0.000000e+00 : f32
    %39 = vector.broadcast %cst_23 : f32 to vector<8x256xf32>
    %40 = arith.maximumf %38, %39 : vector<8x256xf32>
    %41 = arith.truncf %40 : vector<8x256xf32> to vector<8x256xbf16>
    %cst_24 = arith.constant dense<0.000000e+00> : vector<8x128xf32>
    %42 = tpu.matmul %41, %6, %cst_24 {dimension_numbers = #tpu.dot_dimension_numbers<[1], [0], [0], [1], [0, 0, 1, 1], [], []>} : vector<8x256xbf16>, vector<256x128xbf16>, vector<8x128xf32> -> vector<8x128xf32>
    %43 = vector.broadcast %7 : vector<1x128xf32> to vector<8x128xf32>
    %44 = arith.addf %42, %43 : vector<8x128xf32>
    %45 = arith.mulf %44, %44 : vector<8x128xf32>
    %cst_25 = arith.constant dense<0.000000e+00> : vector<8xf32>
    %46 = vector.multi_reduction <add>, %45, %cst_25 [1] : vector<8x128xf32> to vector<8xf32>
    %47 = vector.shape_cast %46 : vector<8xf32> to vector<8x1xf32>
    %cst_26 = arith.constant 1.000000e-24 : f32
    %48 = vector.broadcast %cst_26 : f32 to vector<8x1xf32>
    %49 = arith.maximumf %47, %48 : vector<8x1xf32>
    %50 = math.rsqrt %49 : vector<8x1xf32>
    %51 = vector.broadcast %50 : vector<8x1xf32> to vector<8x128xf32>
    %52 = arith.mulf %44, %51 : vector<8x128xf32>
    %c0_27 = arith.constant 0 : index
    %c0_28 = arith.constant 0 : index
    %53 = vector.load %arg1[%c0_27, %c0_28] : memref<8x768xf32, #tpu.memory_space<vmem>>, vector<8x768xf32>
    %54 = arith.truncf %53 : vector<8x768xf32> to vector<8x768xbf16>
    %cst_29 = arith.constant dense<0.000000e+00> : vector<8x128xf32>
    %55 = tpu.matmul %54, %0, %cst_29 {dimension_numbers = #tpu.dot_dimension_numbers<[1], [0], [0], [1], [0, 0, 1, 1], [], []>} : vector<8x768xbf16>, vector<768x128xbf16>, vector<8x128xf32> -> vector<8x128xf32>
    %56 = vector.broadcast %1 : vector<1x128xf32> to vector<8x128xf32>
    %57 = arith.addf %55, %56 : vector<8x128xf32>
    %58 = arith.truncf %57 : vector<8x128xf32> to vector<8x128xbf16>
    %cst_30 = arith.constant dense<0.000000e+00> : vector<8x256xf32>
    %59 = tpu.matmul %58, %2, %cst_30 {dimension_numbers = #tpu.dot_dimension_numbers<[1], [0], [0], [1], [0, 0, 1, 1], [], []>} : vector<8x128xbf16>, vector<128x256xbf16>, vector<8x256xf32> -> vector<8x256xf32>
    %60 = vector.broadcast %3 : vector<1x256xf32> to vector<8x256xf32>
    %61 = arith.addf %59, %60 : vector<8x256xf32>
    %cst_31 = arith.constant dense<0.000000e+00> : vector<256xf32>
    %62 = vector.multi_reduction <add>, %61, %cst_31 [0] : vector<8x256xf32> to vector<256xf32>
    %63 = vector.shape_cast %62 : vector<256xf32> to vector<1x256xf32>
    %cst_32 = arith.constant 8.000000e+00 : f32
    %64 = vector.broadcast %cst_32 : f32 to vector<1x256xf32>
    %65 = arith.divf %63, %64 : vector<1x256xf32>
    %66 = vector.broadcast %65 : vector<1x256xf32> to vector<8x256xf32>
    %67 = arith.subf %61, %66 : vector<8x256xf32>
    %68 = arith.mulf %67, %67 : vector<8x256xf32>
    %cst_33 = arith.constant dense<0.000000e+00> : vector<256xf32>
    %69 = vector.multi_reduction <add>, %68, %cst_33 [0] : vector<8x256xf32> to vector<256xf32>
    %70 = vector.shape_cast %69 : vector<256xf32> to vector<1x256xf32>
    %cst_34 = arith.constant 8.000000e+00 : f32
    %71 = vector.broadcast %cst_34 : f32 to vector<1x256xf32>
    %72 = arith.divf %70, %71 : vector<1x256xf32>
    %73 = vector.broadcast %65 : vector<1x256xf32> to vector<8x256xf32>
    %74 = arith.subf %61, %73 : vector<8x256xf32>
    %cst_35 = arith.constant 9.99999974E-6 : f32
    %75 = vector.broadcast %cst_35 : f32 to vector<1x256xf32>
    %76 = arith.addf %72, %75 : vector<1x256xf32>
    %77 = math.rsqrt %76 : vector<1x256xf32>
    %78 = vector.broadcast %77 : vector<1x256xf32> to vector<8x256xf32>
    %79 = arith.mulf %74, %78 : vector<8x256xf32>
    %80 = vector.broadcast %4 : vector<1x256xf32> to vector<8x256xf32>
    %81 = arith.mulf %79, %80 : vector<8x256xf32>
    %82 = vector.broadcast %5 : vector<1x256xf32> to vector<8x256xf32>
    %83 = arith.addf %81, %82 : vector<8x256xf32>
    %cst_36 = arith.constant 0.000000e+00 : f32
    %84 = vector.broadcast %cst_36 : f32 to vector<8x256xf32>
    %85 = arith.maximumf %83, %84 : vector<8x256xf32>
    %86 = arith.truncf %85 : vector<8x256xf32> to vector<8x256xbf16>
    %cst_37 = arith.constant dense<0.000000e+00> : vector<8x128xf32>
    %87 = tpu.matmul %86, %6, %cst_37 {dimension_numbers = #tpu.dot_dimension_numbers<[1], [0], [0], [1], [0, 0, 1, 1], [], []>} : vector<8x256xbf16>, vector<256x128xbf16>, vector<8x128xf32> -> vector<8x128xf32>
    %88 = vector.broadcast %7 : vector<1x128xf32> to vector<8x128xf32>
    %89 = arith.addf %87, %88 : vector<8x128xf32>
    %90 = arith.mulf %89, %89 : vector<8x128xf32>
    %cst_38 = arith.constant dense<0.000000e+00> : vector<8xf32>
    %91 = vector.multi_reduction <add>, %90, %cst_38 [1] : vector<8x128xf32> to vector<8xf32>
    %92 = vector.shape_cast %91 : vector<8xf32> to vector<8x1xf32>
    %cst_39 = arith.constant 1.000000e-24 : f32
    %93 = vector.broadcast %cst_39 : f32 to vector<8x1xf32>
    %94 = arith.maximumf %92, %93 : vector<8x1xf32>
    %95 = math.rsqrt %94 : vector<8x1xf32>
    %96 = vector.broadcast %95 : vector<8x1xf32> to vector<8x128xf32>
    %97 = arith.mulf %89, %96 : vector<8x128xf32>
    %c0_40 = arith.constant 0 : index
    %c0_41 = arith.constant 0 : index
    %98 = vector.load %arg11[%c0_40, %c0_41] : memref<16x128xf32, #tpu.memory_space<vmem>>, vector<8x128xf32>
    tpu.vector_store %arg11[%c0_40, %c0_41], %12 {strides = array<i32>} : memref<16x128xf32, #tpu.memory_space<vmem>>, vector<8x128xf32>,
    %c8 = arith.constant 8 : index
    %c0_42 = arith.constant 0 : index
    %99 = vector.load %arg11[%c8, %c0_42] : memref<16x128xf32, #tpu.memory_space<vmem>>, vector<8x128xf32>
    tpu.vector_store %arg11[%c8, %c0_42], %57 {strides = array<i32>} : memref<16x128xf32, #tpu.memory_space<vmem>>, vector<8x128xf32>,
    %c0_43 = arith.constant 0 : index
    %c0_44 = arith.constant 0 : index
    %100 = vector.load %arg10[%c0_43, %c0_44] : memref<16x128xf32, #tpu.memory_space<vmem>>, vector<8x128xf32>
    tpu.vector_store %arg10[%c0_43, %c0_44], %52 {strides = array<i32>} : memref<16x128xf32, #tpu.memory_space<vmem>>, vector<8x128xf32>,
    %c8_45 = arith.constant 8 : index
    %c0_46 = arith.constant 0 : index
    %101 = vector.load %arg10[%c8_45, %c0_46] : memref<16x128xf32, #tpu.memory_space<vmem>>, vector<8x128xf32>
    tpu.vector_store %arg10[%c8_45, %c0_46], %97 {strides = array<i32>} : memref<16x128xf32, #tpu.memory_space<vmem>>, vector<8x128xf32>,
    %c0_47 = arith.constant 0 : index
    %c0_48 = arith.constant 0 : index
    %102 = vector.load %arg10[%c0_47, %c0_48] : memref<16x128xf32, #tpu.memory_space<vmem>>, vector<16x128xf32>
    %103 = arith.truncf %102 : vector<16x128xf32> to vector<16x128xbf16>
    %cst_49 = arith.constant dense<0.000000e+00> : vector<16x16xf32>
    %104 = tpu.matmul %103, %103, %cst_49 {dimension_numbers = #tpu.dot_dimension_numbers<[1], [1], [0], [0], [0, 0, 1, 0], [], []>} : vector<16x128xbf16>, vector<16x128xbf16>, vector<16x16xf32> -> vector<16x16xf32>
    %cst_50 = arith.constant 14.2857141 : f32
    %105 = vector.broadcast %cst_50 : f32 to vector<16x16xf32>
    %106 = arith.mulf %104, %105 : vector<16x16xf32>
    %107 = tpu.iota {dimensions = array<i32: 0>} : vector<16x16xi32>
    %108 = tpu.iota {dimensions = array<i32: 1>} : vector<16x16xi32>
    %c1_i32 = arith.constant 1 : i32
    %109 = vector.broadcast %c1_i32 : i32 to vector<16x16xi32>
    %110 = arith.xori %107, %109 : vector<16x16xi32>
    %111 = arith.cmpi eq, %108, %110 : vector<16x16xi32>
    %cst_51 = arith.constant 1.000000e+00 : f32
    %cst_52 = arith.constant 0.000000e+00 : f32
    %112 = vector.broadcast %cst_51 : f32 to vector<16x16xf32>
    %113 = vector.broadcast %cst_52 : f32 to vector<16x16xf32>
    %114 = arith.select %111, %112, %113 : vector<16x16xi1>, vector<16x16xf32>
    %cst_53 = arith.constant dense<0xFF800000> : vector<16xf32>
    %115 = vector.multi_reduction <maximumf>, %106, %cst_53 [1] : vector<16x16xf32> to vector<16xf32>
    %116 = vector.shape_cast %115 : vector<16xf32> to vector<16x1xf32>
    %117 = vector.broadcast %116 : vector<16x1xf32> to vector<16x16xf32>
    %118 = arith.subf %106, %117 : vector<16x16xf32>
    %119 = math.exp %118 : vector<16x16xf32>
    %cst_54 = arith.constant dense<0.000000e+00> : vector<16xf32>
    %120 = vector.multi_reduction <add>, %119, %cst_54 [1] : vector<16x16xf32> to vector<16xf32>
    %121 = vector.shape_cast %120 : vector<16xf32> to vector<16x1xf32>
    %122 = math.log %121 : vector<16x1xf32>
    %123 = vector.broadcast %122 : vector<16x1xf32> to vector<16x16xf32>
    %124 = arith.subf %118, %123 : vector<16x16xf32>
    %125 = arith.mulf %114, %124 : vector<16x16xf32>
    %cst_55 = arith.constant dense<0.000000e+00> : vector<16xf32>
    %126 = vector.multi_reduction <add>, %125, %cst_55 [1] : vector<16x16xf32> to vector<16xf32>
    %127 = vector.shape_cast %126 : vector<16xf32> to vector<16x1xf32>
    %cst_56 = arith.constant dense<0.000000e+00> : vector<16xf32>
    %128 = vector.multi_reduction <add>, %114, %cst_56 [1] : vector<16x16xf32> to vector<16xf32>
    %129 = vector.shape_cast %128 : vector<16xf32> to vector<16x1xf32>
    %130 = arith.divf %127, %129 : vector<16x1xf32>
    %131 = vector.shape_cast %130 : vector<16x1xf32> to vector<1x16x1xf32>
    %cst_57 = arith.constant dense<0.000000e+00> : vector<1xf32>
    %132 = vector.multi_reduction <add>, %131, %cst_57 [1, 2] : vector<1x16x1xf32> to vector<1xf32>
    %133 = vector.shape_cast %132 : vector<1xf32> to vector<1x1x1xf32>
    %134 = vector.extract %133[0, 0, 0] : f32 from vector<1x1x1xf32>
    %cst_58 = arith.constant 0.000000e+00 : f32
    %135 = arith.subf %cst_58, %134 : f32
    %cst_59 = arith.constant 1.600000e+01 : f32
    %136 = arith.divf %135, %cst_59 : f32
    %c0_60 = arith.constant 0 : index
    %137 = memref.load %arg12[%c0_60] : memref<1xf32, #tpu.memory_space<smem>>
    memref.store %136, %arg12[%c0_60] : memref<1xf32, #tpu.memory_space<smem>>
    return
  }
}

</mosaic_0001>

<llo_original>
// kernel: tpu_custom_call.1
$region0: #{tpu_custom_call.1}
  #allocation0 [shape = 'u32[]', space=smem, size = 0x4, offset = 0x4, fixed_abs, tag = 'smem constant byte address 0x4 - core index']
  #allocation1 [shape = 'u32[144,128]{1,0:T(1,128)}', space=vmem, size = 0x12000, scoped, tag = 'internal scratch']
  %s0 = inlined_call_operand.hbm [shape: f32[8,768], index: 0, kind: input, shape index: {}]
  %s1 = inlined_call_operand.hbm [shape: f32[8,768], index: 1, kind: input, shape index: {}]
  %s2 = inlined_call_operand.hbm [shape: bf16[768,128], index: 2, kind: input, shape index: {}]
  %s3 = inlined_call_operand.vmem [shape: f32[1,128], index: 3, kind: input, shape index: {}]
  %s4 = inlined_call_operand.hbm [shape: bf16[128,256], index: 4, kind: input, shape index: {}]
  %s5 = inlined_call_operand.vmem [shape: f32[1,256], index: 5, kind: input, shape index: {}]
  %s6 = inlined_call_operand.vmem [shape: f32[1,256], index: 6, kind: input, shape index: {}]
  %s7 = inlined_call_operand.vmem [shape: f32[1,256], index: 7, kind: input, shape index: {}]
  %s8 = inlined_call_operand.hbm [shape: bf16[256,128], index: 8, kind: input, shape index: {}]
  %s9 = inlined_call_operand.vmem [shape: f32[1,128], index: 9, kind: input, shape index: {}]
  %s10 = inlined_call_operand.hbm [shape: f32[16,128], index: 10, kind: output, shape index: {0}]
  %s11 = inlined_call_operand.hbm [shape: f32[16,128], index: 11, kind: output, shape index: {1}]
  %s12 = inlined_call_operand.hbm [shape: f32[1], index: 12, kind: output, shape index: {2}]
  %13 = xla_tuple %s10, %s11, %s12
  %s14 = sld [smem:[#allocation0]]
  $region86: #{tpu_custom_call.1} parent=0
    _
  %s16 = ssub.s32 1, %s14
  %s17 = scalar_select 0, %s16, %s14
  $region1: #{tpu_custom_call.1} parent=0
    #allocation2 [shape = 'u8[24576]{0}', space=vmem, size = 0x6000, scoped, tag = 'input window, operand 0, single buffered']
    #allocation3 [shape = 's32[1]{0}', space=sflag, size = 0x4, scoped, tag = 'scoped memory for tpu_custom_call.1']
    #allocation4 [shape = 's32[1]{0}', space=sflag, size = 0x4, scoped, tag = 'scoped memory for tpu_custom_call.1']
    #allocation5 [shape = 's32[1]{0}', space=sflag, size = 0x4, scoped, tag = 'scoped memory for tpu_custom_call.1']
    #allocation6 [shape = 'u8[24576]{0}', space=vmem, size = 0x6000, scoped, tag = 'input window, operand 1, single buffered']
    #allocation7 [shape = 's32[1]{0}', space=sflag, size = 0x4, scoped, tag = 'scoped memory for tpu_custom_call.1']
    #allocation8 [shape = 'u8[196608]{0}', space=vmem, size = 0x30000, scoped, tag = 'input window, operand 2, single buffered']
    #allocation9 [shape = 'u8[65536]{0}', space=vmem, size = 0x10000, scoped, tag = 'input window, operand 4, single buffered']
    #allocation10 [shape = 's32[1]{0}', space=sflag, size = 0x4, scoped, tag = 'scoped memory for tpu_custom_call.1']
    #allocation11 [shape = 'u8[65536]{0}', space=vmem, size = 0x10000, scoped, tag = 'input window, operand 8, single buffered']
    #allocation12 [shape = 'u8[8192]{0}', space=vmem, size = 0x2000, scoped, tag = 'output window, operand 0, single buffered']
    #allocation13 [shape = 'u8[8192]{0}', space=vmem, size = 0x2000, scoped, tag = 'output window, operand 1, single buffered']
    #allocation14 [shape = 's32[1]{0}', space=sflag, size = 0x4, scoped, tag = 'scoped memory for tpu_custom_call.1']
    #allocation15 [shape = 'u8[512]{0}', space=smem, size = 0x200, scoped, tag = 'output window, operand 2, single buffered']
    %18 = vsyncpa [#allocation3], 0
    %19 = vsyncpa [#allocation7], 0
    %20 = vsyncpa [#allocation10], 0
    %21 = vsyncpa [#allocation4], 0
    %22 = vsyncpa [#allocation14], 0
    %23 = vsyncpa [#allocation5], 0
    // Predicated region
    $region2: #{tpu_custom_call.1} parent=1 // pred_check
      _
    $region3: #{tpu_custom_call.1} parent=1 // pred_check_branch
      %25 = sbr.rel (0) target = $region5
    $region4: #{tpu_custom_call.1} parent=1 // pred_region
      %s27 = ssub.s32 768, 768
      %28 = vsyncadd [#allocation3], %s27
      %s30 = sshll.u32 [#allocation2], 4
      %s31 = int_to_ptr.vmem [resolvable:$true] %s30
      %33 = dma.hbm_to_vmem [thread:$0]  %s0, 768, %s31, [#allocation3]
    $region5: #{tpu_custom_call.1} parent=1 // pred_fallthru
      _
    // Predicated region
    $region6: #{tpu_custom_call.1} parent=1 // pred_check
      _
    $region7: #{tpu_custom_call.1} parent=1 // pred_check_branch
      %35 = sbr.rel (0) target = $region9
    $region8: #{tpu_custom_call.1} parent=1 // pred_region
      %s37 = ssub.s32 768, 768
      %38 = vsyncadd [#allocation7], %s37
      %s40 = sshll.u32 [#allocation6], 4
      %s41 = int_to_ptr.vmem [resolvable:$true] %s40
      %43 = dma.hbm_to_vmem [thread:$0]  %s1, 768, %s41, [#allocation7]
    $region9: #{tpu_custom_call.1} parent=1 // pred_fallthru
      _
    // Predicated region
    $region10: #{tpu_custom_call.1} parent=1 // pred_check
      _
    $region11: #{tpu_custom_call.1} parent=1 // pred_check_branch
      %45 = sbr.rel (0) target = $region13
    $region12: #{tpu_custom_call.1} parent=1 // pred_region
      %s47 = ssub.s32 6144, 6144
      %48 = vsyncadd [#allocation7], %s47
      %s49 = sshll.u32 [#allocation8], 4
      %s50 = int_to_ptr.vmem [resolvable:$true] %s49
      %55 = dma.hbm_to_vmem [thread:$0]  %s2, 6144, %s50, [#allocation7], 64, 64, 4
    $region13: #{tpu_custom_call.1} parent=1 // pred_fallthru
      _
    // Predicated region
    $region14: #{tpu_custom_call.1} parent=1 // pred_check
      _
    $region15: #{tpu_custom_call.1} parent=1 // pred_check_branch
      %57 = sbr.rel (0) target = $region17
    $region16: #{tpu_custom_call.1} parent=1 // pred_region
      _
    $region17: #{tpu_custom_call.1} parent=1 // pred_fallthru
      _
    // Predicated region
    $region18: #{tpu_custom_call.1} parent=1 // pred_check
      _
    $region19: #{tpu_custom_call.1} parent=1 // pred_check_branch
      %59 = sbr.rel (0) target = $region21
    $region20: #{tpu_custom_call.1} parent=1 // pred_region
      %s61 = ssub.s32 2048, 2048
      %62 = vsyncadd [#allocation10], %s61
      %s63 = sshll.u32 [#allocation9], 4
      %s64 = int_to_ptr.vmem [resolvable:$true] %s63
      %69 = dma.hbm_to_vmem [thread:$0]  %s4, 2048, %s64, [#allocation10], 128, 128, 8
    $region21: #{tpu_custom_call.1} parent=1 // pred_fallthru
      _
    // Predicated region
    $region22: #{tpu_custom_call.1} parent=1 // pred_check
      _
    $region23: #{tpu_custom_call.1} parent=1 // pred_check_branch
      %71 = sbr.rel (0) target = $region25
    $region24: #{tpu_custom_call.1} parent=1 // pred_region
      _
    $region25: #{tpu_custom_call.1} parent=1 // pred_fallthru
      _
    // Predicated region
    $region26: #{tpu_custom_call.1} parent=1 // pred_check
      _
    $region27: #{tpu_custom_call.1} parent=1 // pred_check_branch
      %73 = sbr.rel (0) target = $region29
    $region28: #{tpu_custom_call.1} parent=1 // pred_region
      _
    $region29: #{tpu_custom_call.1} parent=1 // pred_fallthru
      _
    // Predicated region
    $region30: #{tpu_custom_call.1} parent=1 // pred_check
      _
    $region31: #{tpu_custom_call.1} parent=1 // pred_check_branch
      %75 = sbr.rel (0) target = $region33
    $region32: #{tpu_custom_call.1} parent=1 // pred_region
      _
    $region33: #{tpu_custom_call.1} parent=1 // pred_fallthru
      _
    // Predicated region
    $region34: #{tpu_custom_call.1} parent=1 // pred_check
      _
    $region35: #{tpu_custom_call.1} parent=1 // pred_check_branch
      %77 = sbr.rel (0) target = $region37
    $region36: #{tpu_custom_call.1} parent=1 // pred_region
      %s79 = ssub.s32 2048, 2048
      %80 = vsyncadd [#allocation10], %s79
      %s81 = sshll.u32 [#allocation11], 4
      %s82 = int_to_ptr.vmem [resolvable:$true] %s81
      %87 = dma.hbm_to_vmem [thread:$0]  %s8, 2048, %s82, [#allocation10], 64, 64, 4
    $region37: #{tpu_custom_call.1} parent=1 // pred_fallthru
      _
    // Predicated region
    $region38: #{tpu_custom_call.1} parent=1 // pred_check
      _
    $region39: #{tpu_custom_call.1} parent=1 // pred_check_branch
      %89 = sbr.rel (0) target = $region41
    $region40: #{tpu_custom_call.1} parent=1 // pred_region
      _
    $region41: #{tpu_custom_call.1} parent=1 // pred_fallthru
      _
    // Predicated region
    $region42: #{tpu_custom_call.1} parent=1 // pred_check
      _
    $region43: #{tpu_custom_call.1} parent=1 // pred_check_branch
      %91 = sbr.rel (0) target = $region45
    $region44: #{tpu_custom_call.1} parent=1 // pred_region
      %92 = dma.done [#allocation3], 768
    $region45: #{tpu_custom_call.1} parent=1 // pred_fallthru
      _
    // Predicated region
    $region46: #{tpu_custom_call.1} parent=1 // pred_check
      _
    $region47: #{tpu_custom_call.1} parent=1 // pred_check_branch
      %94 = sbr.rel (0) target = $region49
    $region48: #{tpu_custom_call.1} parent=1 // pred_region
      %95 = dma.done [#allocation7], 768
    $region49: #{tpu_custom_call.1} parent=1 // pred_fallthru
      _
    // Predicated region
    $region50: #{tpu_custom_call.1} parent=1 // pred_check
      _
    $region51: #{tpu_custom_call.1} parent=1 // pred_check_branch
      %97 = sbr.rel (0) target = $region53
    $region52: #{tpu_custom_call.1} parent=1 // pred_region
      %98 = dma.done [#allocation7], 6144
    $region53: #{tpu_custom_call.1} parent=1 // pred_fallthru
      _
    // Predicated region
    $region54: #{tpu_custom_call.1} parent=1 // pred_check
      _
    $region55: #{tpu_custom_call.1} parent=1 // pred_check_branch
      %100 = sbr.rel (0) target = $region57
    $region56: #{tpu_custom_call.1} parent=1 // pred_region
      %101 = dma.done [#allocation10], 2048
    $region57: #{tpu_custom_call.1} parent=1 // pred_fallthru
      _
    // Predicated region
    $region58: #{tpu_custom_call.1} parent=1 // pred_check
      _
    $region59: #{tpu_custom_call.1} parent=1 // pred_check_branch
      %103 = sbr.rel (0) target = $region61
    $region60: #{tpu_custom_call.1} parent=1 // pred_region
      %104 = dma.done [#allocation10], 2048
    $region61: #{tpu_custom_call.1} parent=1 // pred_fallthru
      _
    %v106 = vld [vmem:[#allocation8] sm:$0xf]
    %v107 = vld [vmem:[#allocation8 + $0x4] sm:$0xf]
    %v108 = vld [vmem:[#allocation8 + $0x8] sm:$0xf]
    %v109 = vld [vmem:[#allocation8 + $0xc] sm:$0xf]
    %v110 = vld [vmem:[#allocation8 + $0x10] sm:$0xf]
    %v111 = vld [vmem:[#allocation8 + $0x14] sm:$0xf]
    %v112 = vld [vmem:[#allocation8 + $0x18] sm:$0xf]
    %v113 = vld [vmem:[#allocation8 + $0x1c] sm:$0xf]
    %v114 = vld [vmem:[#allocation8 + $0x20] sm:$0xf]
    %v115 = vld [vmem:[#allocation8 + $0x24] sm:$0xf]
    %v116 = vld [vmem:[#allocation8 + $0x28] sm:$0xf]
    %v117 = vld [vmem:[#allocation8 + $0x2c] sm:$0xf]
    %v118 = vld [vmem:[#allocation8 + $0x30] sm:$0xf]
    %v119 = vld [vmem:[#allocation8 + $0x34] sm:$0xf]
    %v120 = vld [vmem:[#allocation8 + $0x38] sm:$0xf]
    %v121 = vld [vmem:[#allocation8 + $0x3c] sm:$0xf]
    %v122 = vld [vmem:[#allocation8 + $0x40] sm:$0xf]
    %v123 = vld [vmem:[#allocation8 + $0x44] sm:$0xf]
    %v124 = vld [vmem:[#allocation8 + $0x48] sm:$0xf]
    %v125 = vld [vmem:[#allocation8 + $0x4c] sm:$0xf]
    %v126 = vld [vmem:[#allocation8 + $0x50] sm:$0xf]
    %v127 = vld [vmem:[#allocation8 + $0x54] sm:$0xf]
    %v128 = vld [vmem:[#allocation8 + $0x58] sm:$0xf]
    %v129 = vld [vmem:[#allocation8 + $0x5c] sm:$0xf]
    %v130 = vld [vmem:[#allocation8 + $0x60] sm:$0xf]
    %v131 = vld [vmem:[#allocation8 + $0x64] sm:$0xf]
    %v132 = vld [vmem:[#allocation8 + $0x68] sm:$0xf]
    %v133 = vld [vmem:[#allocation8 + $0x6c] sm:$0xf]
    %v134 = vld [vmem:[#allocation8 + $0x70] sm:$0xf]
    %v135 = vld [vmem:[#allocation8 + $0x74] sm:$0xf]
    %v136 = vld [vmem:[#allocation8 + $0x78] sm:$0xf]
    %v137 = vld [vmem:[#allocation8 + $0x7c] sm:$0xf]
    %v138 = vld [vmem:[#allocation8 + $0x80] sm:$0xf]
    %v139 = vld [vmem:[#allocation8 + $0x84] sm:$0xf]
    %v140 = vld [vmem:[#allocation8 + $0x88] sm:$0xf]
    %v141 = vld [vmem:[#allocation8 + $0x8c] sm:$0xf]
    %v142 = vld [vmem:[#allocation8 + $0x90] sm:$0xf]
    %v143 = vld [vmem:[#allocation8 + $0x94] sm:$0xf]
    %v144 = vld [vmem:[#allocation8 + $0x98] sm:$0xf]
    %v145 = vld [vmem:[#allocation8 + $0x9c] sm:$0xf]
    %v146 = vld [vmem:[#allocation8 + $0xa0] sm:$0xf]
    %v147 = vld [vmem:[#allocation8 + $0xa4] sm:$0xf]
    %v148 = vld [vmem:[#allocation8 + $0xa8] sm:$0xf]
    %v149 = vld [vmem:[#allocation8 + $0xac] sm:$0xf]
    %v150 = vld [vmem:[#allocation8 + $0xb0] sm:$0xf]
    %v151 = vld [vmem:[#allocation8 + $0xb4] sm:$0xf]
    %v152 = vld [vmem:[#allocation8 + $0xb8] sm:$0xf]
    %v153 = vld [vmem:[#allocation8 + $0xbc] sm:$0xf]
    %v154 = vld [vmem:[#allocation8 + $0xc0] sm:$0xf]
    %v155 = vld [vmem:[#allocation8 + $0xc4] sm:$0xf]
    %v156 = vld [vmem:[#allocation8 + $0xc8] sm:$0xf]
    %v157 = vld [vmem:[#allocation8 + $0xcc] sm:$0xf]
    %v158 = vld [vmem:[#allocation8 + $0xd0] sm:$0xf]
    %v159 = vld [vmem:[#allocation8 + $0xd4] sm:$0xf]
    %v160 = vld [vmem:[#allocation8 + $0xd8] sm:$0xf]
    %v161 = vld [vmem:[#allocation8 + $0xdc] sm:$0xf]
    %v162 = vld [vmem:[#allocation8 + $0xe0] sm:$0xf]
    %v163 = vld [vmem:[#allocation8 + $0xe4] sm:$0xf]
    %v164 = vld [vmem:[#allocation8 + $0xe8] sm:$0xf]
    %v165 = vld [vmem:[#allocation8 + $0xec] sm:$0xf]
    %v166 = vld [vmem:[#allocation8 + $0xf0] sm:$0xf]
    %v167 = vld [vmem:[#allocation8 + $0xf4] sm:$0xf]
    %v168 = vld [vmem:[#allocation8 + $0xf8] sm:$0xf]
    %v169 = vld [vmem:[#allocation8 + $0xfc] sm:$0xf]
    %v170 = vld [vmem:[#allocation8 + $0x100] sm:$0xf]
    %v171 = vld [vmem:[#allocation8 + $0x104] sm:$0xf]
    %v172 = vld [vmem:[#allocation8 + $0x108] sm:$0xf]
    %v173 = vld [vmem:[#allocation8 + $0x10c] sm:$0xf]
    %v174 = vld [vmem:[#allocation8 + $0x110] sm:$0xf]
    %v175 = vld [vmem:[#allocation8 + $0x114] sm:$0xf]
    %v176 = vld [vmem:[#allocation8 + $0x118] sm:$0xf]
    %v177 = vld [vmem:[#allocation8 + $0x11c] sm:$0xf]
    %v178 = vld [vmem:[#allocation8 + $0x120] sm:$0xf]
    %v179 = vld [vmem:[#allocation8 + $0x124] sm:$0xf]
    %v180 = vld [vmem:[#allocation8 + $0x128] sm:$0xf]
    %v181 = vld [vmem:[#allocation8 + $0x12c] sm:$0xf]
    %v182 = vld [vmem:[#allocation8 + $0x130] sm:$0xf]
    %v183 = vld [vmem:[#allocation8 + $0x134] sm:$0xf]
    %v184 = vld [vmem:[#allocation8 + $0x138] sm:$0xf]
    %v185 = vld [vmem:[#allocation8 + $0x13c] sm:$0xf]
    %v186 = vld [vmem:[#allocation8 + $0x140] sm:$0xf]
    %v187 = vld [vmem:[#allocation8 + $0x144] sm:$0xf]
    %v188 = vld [vmem:[#allocation8 + $0x148] sm:$0xf]
    %v189 = vld [vmem:[#allocation8 + $0x14c] sm:$0xf]
    %v190 = vld [vmem:[#allocation8 + $0x150] sm:$0xf]
    %v191 = vld [vmem:[#allocation8 + $0x154] sm:$0xf]
    %v192 = vld [vmem:[#allocation8 + $0x158] sm:$0xf]
    %v193 = vld [vmem:[#allocation8 + $0x15c] sm:$0xf]
    %v194 = vld [vmem:[#allocation8 + $0x160] sm:$0xf]
    %v195 = vld [vmem:[#allocation8 + $0x164] sm:$0xf]
    %v196 = vld [vmem:[#allocation8 + $0x168] sm:$0xf]
    %v197 = vld [vmem:[#allocation8 + $0x16c] sm:$0xf]
    %v198 = vld [vmem:[#allocation8 + $0x170] sm:$0xf]
    %v199 = vld [vmem:[#allocation8 + $0x174] sm:$0xf]
    %v200 = vld [vmem:[#allocation8 + $0x178] sm:$0xf]
    %v201 = vld [vmem:[#allocation8 + $0x17c] sm:$0xf]
    %v202 = vld [vmem:[%s3] sm:$0x1]
    %v203 = vld [vmem:[#allocation9] sm:$0xff]
    %v204 = vld [vmem:[#allocation9 + $0x8] sm:$0xff]
    %v205 = vld [vmem:[#allocation9 + $0x10] sm:$0xff]
    %v206 = vld [vmem:[#allocation9 + $0x18] sm:$0xff]
    %v207 = vld [vmem:[#allocation9 + $0x20] sm:$0xff]
    %v208 = vld [vmem:[#allocation9 + $0x28] sm:$0xff]
    %v209 = vld [vmem:[#allocation9 + $0x30] sm:$0xff]
    %v210 = vld [vmem:[#allocation9 + $0x38] sm:$0xff]
    %v211 = vld [vmem:[#allocation9 + $0x40] sm:$0xff]
    %v212 = vld [vmem:[#allocation9 + $0x48] sm:$0xff]
    %v213 = vld [vmem:[#allocation9 + $0x50] sm:$0xff]
    %v214 = vld [vmem:[#allocation9 + $0x58] sm:$0xff]
    %v215 = vld [vmem:[#allocation9 + $0x60] sm:$0xff]
    %v216 = vld [vmem:[#allocation9 + $0x68] sm:$0xff]
    %v217 = vld [vmem:[#allocation9 + $0x70] sm:$0xff]
    %v218 = vld [vmem:[#allocation9 + $0x78] sm:$0xff]
    %v219 = vld [vmem:[%s5] sm:$0x3]
    %v220 = vld [vmem:[%s6] sm:$0x3]
    %v221 = vld [vmem:[%s7] sm:$0x3]
    %v222 = vld [vmem:[#allocation11] sm:$0xf]
    %v223 = vld [vmem:[#allocation11 + $0x4] sm:$0xf]
    %v224 = vld [vmem:[#allocation11 + $0x8] sm:$0xf]
    %v225 = vld [vmem:[#allocation11 + $0xc] sm:$0xf]
    %v226 = vld [vmem:[#allocation11 + $0x10] sm:$0xf]
    %v227 = vld [vmem:[#allocation11 + $0x14] sm:$0xf]
    %v228 = vld [vmem:[#allocation11 + $0x18] sm:$0xf]
    %v229 = vld [vmem:[#allocation11 + $0x1c] sm:$0xf]
    %v230 = vld [vmem:[#allocation11 + $0x20] sm:$0xf]
    %v231 = vld [vmem:[#allocation11 + $0x24] sm:$0xf]
    %v232 = vld [vmem:[#allocation11 + $0x28] sm:$0xf]
    %v233 = vld [vmem:[#allocation11 + $0x2c] sm:$0xf]
    %v234 = vld [vmem:[#allocation11 + $0x30] sm:$0xf]
    %v235 = vld [vmem:[#allocation11 + $0x34] sm:$0xf]
    %v236 = vld [vmem:[#allocation11 + $0x38] sm:$0xf]
    %v237 = vld [vmem:[#allocation11 + $0x3c] sm:$0xf]
    %v238 = vld [vmem:[#allocation11 + $0x40] sm:$0xf]
    %v239 = vld [vmem:[#allocation11 + $0x44] sm:$0xf]
    %v240 = vld [vmem:[#allocation11 + $0x48] sm:$0xf]
    %v241 = vld [vmem:[#allocation11 + $0x4c] sm:$0xf]
    %v242 = vld [vmem:[#allocation11 + $0x50] sm:$0xf]
    %v243 = vld [vmem:[#allocation11 + $0x54] sm:$0xf]
    %v244 = vld [vmem:[#allocation11 + $0x58] sm:$0xf]
    %v245 = vld [vmem:[#allocation11 + $0x5c] sm:$0xf]
    %v246 = vld [vmem:[#allocation11 + $0x60] sm:$0xf]
    %v247 = vld [vmem:[#allocation11 + $0x64] sm:$0xf]
    %v248 = vld [vmem:[#allocation11 + $0x68] sm:$0xf]
    %v249 = vld [vmem:[#allocation11 + $0x6c] sm:$0xf]
    %v250 = vld [vmem:[#allocation11 + $0x70] sm:$0xf]
    %v251 = vld [vmem:[#allocation11 + $0x74] sm:$0xf]
    %v252 = vld [vmem:[#allocation11 + $0x78] sm:$0xf]
    %v253 = vld [vmem:[#allocation11 + $0x7c] sm:$0xf]
    %v254 = vld [vmem:[%s9] sm:$0x1]
    %v255 = vld [vmem:[#allocation2] sm:$0xff]
    %v256 = vld [vmem:[#allocation2 + $0x8] sm:$0xff]
    %v257 = vld [vmem:[#allocation2 + $0x10] sm:$0xff]
    %v258 = vld [vmem:[#allocation2 + $0x18] sm:$0xff]
    %v259 = vld [vmem:[#allocation2 + $0x20] sm:$0xff]
    %v260 = vld [vmem:[#allocation2 + $0x28] sm:$0xff]
    %v261 = vpack.c.bf16 %v255, %v255
    %v262 = vpack.c.bf16 %v256, %v256
    %v263 = vpack.c.bf16 %v257, %v257
    %v264 = vpack.c.bf16 %v258, %v258
    %v265 = vpack.c.bf16 %v259, %v259
    %v266 = vpack.c.bf16 %v260, %v260
    %v268 = vlaneseq
    %v269 = vshrl.u32 %v268, 7
    %v270 = vsub.s32 0, %v269
    %v271 = vrot.slane %v202, %v270
    %v369 = vunpack.c.l.b16 %v106
    %v370 = vunpack.c.l.b16 %v107
    %v371 = vunpack.c.l.b16 %v108
    %v372 = vunpack.c.l.b16 %v109
    %v373 = vunpack.c.l.b16 %v110
    %v374 = vunpack.c.l.b16 %v111
    %v375 = vunpack.c.l.b16 %v112
    %v376 = vunpack.c.l.b16 %v113
    %v377 = vunpack.c.l.b16 %v114
    %v378 = vunpack.c.l.b16 %v115
    %v379 = vunpack.c.l.b16 %v116
    %v380 = vunpack.c.l.b16 %v117
    %v381 = vunpack.c.l.b16 %v118
    %v382 = vunpack.c.l.b16 %v119
    %v383 = vunpack.c.l.b16 %v120
    %v384 = vunpack.c.l.b16 %v121
    %v385 = vunpack.c.l.b16 %v122
    %v386 = vunpack.c.l.b16 %v123
    %v387 = vunpack.c.l.b16 %v124
    %v388 = vunpack.c.l.b16 %v125
    %v389 = vunpack.c.l.b16 %v126
    %v390 = vunpack.c.l.b16 %v127
    %v391 = vunpack.c.l.b16 %v128
    %v392 = vunpack.c.l.b16 %v129
    %v393 = vunpack.c.l.b16 %v130
    %v394 = vunpack.c.l.b16 %v131
    %v395 = vunpack.c.l.b16 %v132
    %v396 = vunpack.c.l.b16 %v133
    %v397 = vunpack.c.l.b16 %v134
    %v398 = vunpack.c.l.b16 %v135
    %v399 = vunpack.c.l.b16 %v136
    %v400 = vunpack.c.l.b16 %v137
    %v401 = vunpack.c.l.b16 %v138
    %v402 = vunpack.c.l.b16 %v139
    %v403 = vunpack.c.l.b16 %v140
    %v404 = vunpack.c.l.b16 %v141
    %v405 = vunpack.c.l.b16 %v142
    %v406 = vunpack.c.l.b16 %v143
    %v407 = vunpack.c.l.b16 %v144
    %v408 = vunpack.c.l.b16 %v145
    %v409 = vunpack.c.l.b16 %v146
    %v410 = vunpack.c.l.b16 %v147
    %v411 = vunpack.c.l.b16 %v148
    %v412 = vunpack.c.l.b16 %v149
    %v413 = vunpack.c.l.b16 %v150
    %v414 = vunpack.c.l.b16 %v151
    %v415 = vunpack.c.l.b16 %v152
    %v416 = vunpack.c.l.b16 %v153
    %v417 = vunpack.c.l.b16 %v154
    %v418 = vunpack.c.l.b16 %v155
    %v419 = vunpack.c.l.b16 %v156
    %v420 = vunpack.c.l.b16 %v157
    %v421 = vunpack.c.l.b16 %v158
    %v422 = vunpack.c.l.b16 %v159
    %v423 = vunpack.c.l.b16 %v160
    %v424 = vunpack.c.l.b16 %v161
    %v425 = vunpack.c.l.b16 %v162
    %v426 = vunpack.c.l.b16 %v163
    %v427 = vunpack.c.l.b16 %v164
    %v428 = vunpack.c.l.b16 %v165
    %v429 = vunpack.c.l.b16 %v166
    %v430 = vunpack.c.l.b16 %v167
    %v431 = vunpack.c.l.b16 %v168
    %v432 = vunpack.c.l.b16 %v169
    %v433 = vunpack.c.l.b16 %v170
    %v434 = vunpack.c.l.b16 %v171
    %v435 = vunpack.c.l.b16 %v172
    %v436 = vunpack.c.l.b16 %v173
    %v437 = vunpack.c.l.b16 %v174
    %v438 = vunpack.c.l.b16 %v175
    %v439 = vunpack.c.l.b16 %v176
    %v440 = vunpack.c.l.b16 %v177
    %v441 = vunpack.c.l.b16 %v178
    %v442 = vunpack.c.l.b16 %v179
    %v443 = vunpack.c.l.b16 %v180
    %v444 = vunpack.c.l.b16 %v181
    %v445 = vunpack.c.l.b16 %v182
    %v446 = vunpack.c.l.b16 %v183
    %v447 = vunpack.c.l.b16 %v184
    %v448 = vunpack.c.l.b16 %v185
    %v449 = vunpack.c.l.b16 %v186
    %v450 = vunpack.c.l.b16 %v187
    %v451 = vunpack.c.l.b16 %v188
    %v452 = vunpack.c.l.b16 %v189
    %v453 = vunpack.c.l.b16 %v190
    %v454 = vunpack.c.l.b16 %v191
    %v455 = vunpack.c.l.b16 %v192
    %v456 = vunpack.c.l.b16 %v193
    %v457 = vunpack.c.l.b16 %v194
    %v458 = vunpack.c.l.b16 %v195
    %v459 = vunpack.c.l.b16 %v196
    %v460 = vunpack.c.l.b16 %v197
    %v461 = vunpack.c.l.b16 %v198
    %v462 = vunpack.c.l.b16 %v199
    %v463 = vunpack.c.l.b16 %v200
    %v464 = vunpack.c.l.b16 %v201
    %v465 = vpack.c.b16 %v370, %v369
    %v466 = vpack.c.b16 %v372, %v371
    %v467 = vpack.c.b16 %v374, %v373
    %v468 = vpack.c.b16 %v376, %v375
    %v469 = vpack.c.b16 %v378, %v377
    %v470 = vpack.c.b16 %v380, %v379
    %v471 = vpack.c.b16 %v382, %v381
    %v472 = vpack.c.b16 %v384, %v383
    %v473 = vpack.c.b16 %v386, %v385
    %v474 = vpack.c.b16 %v388, %v387
    %v475 = vpack.c.b16 %v390, %v389
    %v476 = vpack.c.b16 %v392, %v391
    %v477 = vpack.c.b16 %v394, %v393
    %v478 = vpack.c.b16 %v396, %v395
    %v479 = vpack.c.b16 %v398, %v397
    %v480 = vpack.c.b16 %v400, %v399
    %v481 = vpack.c.b16 %v402, %v401
    %v482 = vpack.c.b16 %v404, %v403
    %v483 = vpack.c.b16 %v406, %v405
    %v484 = vpack.c.b16 %v408, %v407
    %v485 = vpack.c.b16 %v410, %v409
    %v486 = vpack.c.b16 %v412, %v411
    %v487 = vpack.c.b16 %v414, %v413
    %v488 = vpack.c.b16 %v416, %v415
    %v489 = vpack.c.b16 %v418, %v417
    %v490 = vpack.c.b16 %v420, %v419
    %v491 = vpack.c.b16 %v422, %v421
    %v492 = vpack.c.b16 %v424, %v423
    %v493 = vpack.c.b16 %v426, %v425
    %v494 = vpack.c.b16 %v428, %v427
    %v495 = vpack.c.b16 %v430, %v429
    %v496 = vpack.c.b16 %v432, %v431
    %v497 = vpack.c.b16 %v434, %v433
    %v498 = vpack.c.b16 %v436, %v435
    %v499 = vpack.c.b16 %v438, %v437
    %v500 = vpack.c.b16 %v440, %v439
    %v501 = vpack.c.b16 %v442, %v441
    %v502 = vpack.c.b16 %v444, %v443
    %v503 = vpack.c.b16 %v446, %v445
    %v504 = vpack.c.b16 %v448, %v447
    %v505 = vpack.c.b16 %v450, %v449
    %v506 = vpack.c.b16 %v452, %v451
    %v507 = vpack.c.b16 %v454, %v453
    %v508 = vpack.c.b16 %v456, %v455
    %v509 = vpack.c.b16 %v458, %v457
    %v510 = vpack.c.b16 %v460, %v459
    %v511 = vpack.c.b16 %v462, %v461
    %v512 = vpack.c.b16 %v464, %v463
    %561 = vmatprep.subr.bf16.mxu0 0
    %562 = vmatpush1.bf16.msra.mxu0 %v465
    %563 = vmatprep.subr.bf16.mxu0 0
    %564 = vmatpush1.bf16.msra.mxu0 %v466
    %565 = vmatprep.subr.bf16.mxu0 0
    %566 = vmatpush1.bf16.msra.mxu0 %v467
    %567 = vmatprep.subr.bf16.mxu0 0
    %568 = vmatpush1.bf16.msra.mxu0 %v468
    %569 = vmatprep.subr.bf16.mxu0 0
    %570 = vmatpush1.bf16.msra.mxu0 %v469
    %571 = vmatprep.subr.bf16.mxu0 0
    %572 = vmatpush1.bf16.msra.mxu0 %v470
    %573 = vmatprep.subr.bf16.mxu0 0
    %574 = vmatpush1.bf16.msra.mxu0 %v471
    %575 = vmatprep.subr.bf16.mxu0 0
    %576 = vmatpush1.bf16.msra.mxu0 %v472
    %577 = vmatprep.subr.bf16.mxu0 0
    %578 = vmatpush1.bf16.msra.mxu0 %v473
    %579 = vmatprep.subr.bf16.mxu0 0
    %580 = vmatpush1.bf16.msra.mxu0 %v474
    %581 = vmatprep.subr.bf16.mxu0 0
    %582 = vmatpush1.bf16.msra.mxu0 %v475
    %583 = vmatprep.subr.bf16.mxu0 0
    %584 = vmatpush1.bf16.msra.mxu0 %v476
    %585 = vmatprep.subr.bf16.mxu0 0
    %586 = vmatpush1.bf16.msra.mxu0 %v477
    %587 = vmatprep.subr.bf16.mxu0 0
    %588 = vmatpush1.bf16.msra.mxu0 %v478
    %589 = vmatprep.subr.bf16.mxu0 0
    %590 = vmatpush1.bf16.msra.mxu0 %v479
    %591 = vmatprep.subr.bf16.mxu0 0
    %592 = vmatpush1.bf16.msra.mxu0 %v480
    %593 = vmatprep.mubr.bf16.mxu0 %v262
    %594 = vmatmul.mubr.bf16.gmra.mrb[0].mxu0 %v261
    %v595 = vpop.f32.mrb[0].mxu0
    %v596 = vadd.f32 %v271, %v595
    %v597 = vpop.f32.mrb[0].mxu0
    %v598 = vpop.f32.mrb[0].mxu0
    %v599 = vpop.f32.mrb[0].mxu0
    %600 = vdwg.mxu0
    %601 = vmatprep.subr.bf16.mxu0 0
    %602 = vmatpush1.bf16.msra.mxu0 %v481
    %603 = vmatprep.subr.bf16.mxu0 0
    %604 = vmatpush1.bf16.msra.mxu0 %v482
    %605 = vmatprep.subr.bf16.mxu0 0
    %606 = vmatpush1.bf16.msra.mxu0 %v483
    %607 = vmatprep.subr.bf16.mxu0 0
    %608 = vmatpush1.bf16.msra.mxu0 %v484
    %609 = vmatprep.subr.bf16.mxu0 0
    %610 = vmatpush1.bf16.msra.mxu0 %v485
    %611 = vmatprep.subr.bf16.mxu0 0
    %612 = vmatpush1.bf16.msra.mxu0 %v486
    %613 = vmatprep.subr.bf16.mxu0 0
    %614 = vmatpush1.bf16.msra.mxu0 %v487
    %615 = vmatprep.subr.bf16.mxu0 0
    %616 = vmatpush1.bf16.msra.mxu0 %v488
    %617 = vmatprep.subr.bf16.mxu0 0
    %618 = vmatpush1.bf16.msra.mxu0 %v489
    %619 = vmatprep.subr.bf16.mxu0 0
    %620 = vmatpush1.bf16.msra.mxu0 %v490
    %621 = vmatprep.subr.bf16.mxu0 0
    %622 = vmatpush1.bf16.msra.mxu0 %v491
    %623 = vmatprep.subr.bf16.mxu0 0
    %624 = vmatpush1.bf16.msra.mxu0 %v492
    %625 = vmatprep.subr.bf16.mxu0 0
    %626 = vmatpush1.bf16.msra.mxu0 %v493
    %627 = vmatprep.subr.bf16.mxu0 0
    %628 = vmatpush1.bf16.msra.mxu0 %v494
    %629 = vmatprep.subr.bf16.mxu0 0
    %630 = vmatpush1.bf16.msra.mxu0 %v495
    %631 = vmatprep.subr.bf16.mxu0 0
    %632 = vmatpush1.bf16.msra.mxu0 %v496
    %633 = vmatprep.mubr.bf16.mxu0 %v264
    %634 = vmatmul.mubr.bf16.gmra.mrb[0].mxu0 %v263
    %v635 = vpop.f32.mrb[0].mxu0
    %v636 = vadd.f32 %v596, %v635
    %v637 = vpop.f32.mrb[0].mxu0
    %v638 = vpop.f32.mrb[0].mxu0
    %v639 = vpop.f32.mrb[0].mxu0
    %640 = vdwg.mxu0
    %641 = vmatprep.subr.bf16.mxu0 0
    %642 = vmatpush1.bf16.msra.mxu0 %v497
    %643 = vmatprep.subr.bf16.mxu0 0
    %644 = vmatpush1.bf16.msra.mxu0 %v498
    %645 = vmatprep.subr.bf16.mxu0 0
    %646 = vmatpush1.bf16.msra.mxu0 %v499
    %647 = vmatprep.subr.bf16.mxu0 0
    %648 = vmatpush1.bf16.msra.mxu0 %v500
    %649 = vmatprep.subr.bf16.mxu0 0
    %650 = vmatpush1.bf16.msra.mxu0 %v501
    %651 = vmatprep.subr.bf16.mxu0 0
    %652 = vmatpush1.bf16.msra.mxu0 %v502
    %653 = vmatprep.subr.bf16.mxu0 0
    %654 = vmatpush1.bf16.msra.mxu0 %v503
    %655 = vmatprep.subr.bf16.mxu0 0
    %656 = vmatpush1.bf16.msra.mxu0 %v504
    %657 = vmatprep.subr.bf16.mxu0 0
    %658 = vmatpush1.bf16.msra.mxu0 %v505
    %659 = vmatprep.subr.bf16.mxu0 0
    %660 = vmatpush1.bf16.msra.mxu0 %v506
    %661 = vmatprep.subr.bf16.mxu0 0
    %662 = vmatpush1.bf16.msra.mxu0 %v507
    %663 = vmatprep.subr.bf16.mxu0 0
    %664 = vmatpush1.bf16.msra.mxu0 %v508
    %665 = vmatprep.subr.bf16.mxu0 0
    %666 = vmatpush1.bf16.msra.mxu0 %v509
    %667 = vmatprep.subr.bf16.mxu0 0
    %668 = vmatpush1.bf16.msra.mxu0 %v510
    %669 = vmatprep.subr.bf16.mxu0 0
    %670 = vmatpush1.bf16.msra.mxu0 %v511
    %671 = vmatprep.subr.bf16.mxu0 0
    %672 = vmatpush1.bf16.msra.mxu0 %v512
    %673 = vmatprep.mubr.bf16.mxu0 %v266
    %674 = vmatmul.mubr.bf16.gmra.mrb[0].mxu0 %v265
    %v675 = vpop.f32.mrb[0].mxu0
    %v676 = vadd.f32 %v636, %v675
    %v677 = vpop.f32.mrb[0].mxu0
    %v678 = vpop.f32.mrb[0].mxu0
    %v679 = vpop.f32.mrb[0].mxu0
    %680 = vdwg.mxu0
    %v681 = vpack.c.bf16 %v676, %v676
    %v683 = vlaneseq
    %v684 = vshrl.u32 %v683, 7
    %v685 = vsub.s32 0, %v684
    %v686 = vrot.slane %v219, %v685
    %v687 = vlaneseq
    %v688 = vshrl.u32 %v687, 7
    %v689 = vsub.s32 1, %v688
    %v690 = vrot.slane %v219, %v689
    %v709 = vunpack.c.l.b16 %v203
    %v710 = vunpack.c.h.b16 %v203
    %v711 = vunpack.c.l.b16 %v204
    %v712 = vunpack.c.h.b16 %v204
    %v713 = vunpack.c.l.b16 %v205
    %v714 = vunpack.c.h.b16 %v205
    %v715 = vunpack.c.l.b16 %v206
    %v716 = vunpack.c.h.b16 %v206
    %v717 = vunpack.c.l.b16 %v207
    %v718 = vunpack.c.h.b16 %v207
    %v719 = vunpack.c.l.b16 %v208
    %v720 = vunpack.c.h.b16 %v208
    %v721 = vunpack.c.l.b16 %v209
    %v722 = vunpack.c.h.b16 %v209
    %v723 = vunpack.c.l.b16 %v210
    %v724 = vunpack.c.h.b16 %v210
    %v725 = vunpack.c.l.b16 %v211
    %v726 = vunpack.c.h.b16 %v211
    %v727 = vunpack.c.l.b16 %v212
    %v728 = vunpack.c.h.b16 %v212
    %v729 = vunpack.c.l.b16 %v213
    %v730 = vunpack.c.h.b16 %v213
    %v731 = vunpack.c.l.b16 %v214
    %v732 = vunpack.c.h.b16 %v214
    %v733 = vunpack.c.l.b16 %v215
    %v734 = vunpack.c.h.b16 %v215
    %v735 = vunpack.c.l.b16 %v216
    %v736 = vunpack.c.h.b16 %v216
    %v737 = vunpack.c.l.b16 %v217
    %v738 = vunpack.c.h.b16 %v217
    %v739 = vunpack.c.l.b16 %v218
    %v740 = vunpack.c.h.b16 %v218
    %v741 = vpack.c.b16 %v711, %v709
    %v742 = vpack.c.b16 %v712, %v710
    %v743 = vpack.c.b16 %v715, %v713
    %v744 = vpack.c.b16 %v716, %v714
    %v745 = vpack.c.b16 %v719, %v717
    %v746 = vpack.c.b16 %v720, %v718
    %v747 = vpack.c.b16 %v723, %v721
    %v748 = vpack.c.b16 %v724, %v722
    %v749 = vpack.c.b16 %v727, %v725
    %v750 = vpack.c.b16 %v728, %v726
    %v751 = vpack.c.b16 %v731, %v729
    %v752 = vpack.c.b16 %v732, %v730
    %v753 = vpack.c.b16 %v735, %v733
    %v754 = vpack.c.b16 %v736, %v734
    %v755 = vpack.c.b16 %v739, %v737
    %v756 = vpack.c.b16 %v740, %v738
    %773 = vmatprep.subr.bf16.mxu0 %v742
    %774 = vmatpush1.bf16.msra.mxu0 %v741
    %775 = vmatprep.subr.bf16.mxu0 %v744
    %776 = vmatpush1.bf16.msra.mxu0 %v743
    %777 = vmatprep.subr.bf16.mxu0 %v746
    %778 = vmatpush1.bf16.msra.mxu0 %v745
    %779 = vmatprep.subr.bf16.mxu0 %v748
    %780 = vmatpush1.bf16.msra.mxu0 %v747
    %781 = vmatprep.subr.bf16.mxu0 %v750
    %782 = vmatpush1.bf16.msra.mxu0 %v749
    %783 = vmatprep.subr.bf16.mxu0 %v752
    %784 = vmatpush1.bf16.msra.mxu0 %v751
    %785 = vmatprep.subr.bf16.mxu0 %v754
    %786 = vmatpush1.bf16.msra.mxu0 %v753
    %787 = vmatprep.subr.bf16.mxu0 %v756
    %788 = vmatpush1.bf16.msra.mxu0 %v755
    %789 = vmatprep.subr.bf16.mxu0 0
    %790 = vmatpush1.bf16.msra.mxu0 0
    %791 = vmatprep.subr.bf16.mxu0 0
    %792 = vmatpush1.bf16.msra.mxu0 0
    %793 = vmatprep.subr.bf16.mxu0 0
    %794 = vmatpush1.bf16.msra.mxu0 0
    %795 = vmatprep.subr.bf16.mxu0 0
    %796 = vmatpush1.bf16.msra.mxu0 0
    %797 = vmatprep.subr.bf16.mxu0 0
    %798 = vmatpush1.bf16.msra.mxu0 0
    %799 = vmatprep.subr.bf16.mxu0 0
    %800 = vmatpush1.bf16.msra.mxu0 0
    %801 = vmatprep.subr.bf16.mxu0 0
    %802 = vmatpush1.bf16.msra.mxu0 0
    %803 = vmatprep.subr.bf16.mxu0 0
    %804 = vmatpush1.bf16.msra.mxu0 0
    %805 = vmatprep.mubr.bf16.mxu0 0
    %806 = vmatmul.mubr.bf16.gmra.mrb[0].mxu0 %v681
    %v807 = vpop.f32.mrb[0].mxu0
    %v808 = vadd.f32 %v686, %v807
    %v809 = vpop.f32.mrb[0].mxu0
    %v810 = vadd.f32 %v690, %v809
    %v811 = vpop.f32.mrb[0].mxu0
    %v812 = vpop.f32.mrb[0].mxu0
    %813 = vdwg.mxu0
    %v814 = vrot.slane %v808, 4
    %v815 = vadd.f32 %v808, %v814
    %v816 = vrot.slane %v815, 2
    %v817 = vadd.f32 %v815, %v816
    %v818 = vrot.slane %v817, 1
    %v819 = vadd.f32 %v817, %v818
    %v820 = vrot.slane %v810, 4
    %v821 = vadd.f32 %v810, %v820
    %v822 = vrot.slane %v821, 2
    %v823 = vadd.f32 %v821, %v822
    %v824 = vrot.slane %v823, 1
    %v825 = vadd.f32 %v823, %v824
    %v826 = vrcp.pop 8.0
    %v827 = vmul.f32 %v819, %v826
    %v828 = vmul.f32 %v825, %v826
    %v829 = vsub.f32 %v808, %v827
    %v830 = vsub.f32 %v810, %v828
    %v831 = vmul.f32 %v829, %v829
    %v832 = vmul.f32 %v830, %v830
    %v833 = vrot.slane %v831, 4
    %v834 = vadd.f32 %v831, %v833
    %v835 = vrot.slane %v834, 2
    %v836 = vadd.f32 %v834, %v835
    %v837 = vrot.slane %v836, 1
    %v838 = vadd.f32 %v836, %v837
    %v839 = vrot.slane %v832, 4
    %v840 = vadd.f32 %v832, %v839
    %v841 = vrot.slane %v840, 2
    %v842 = vadd.f32 %v840, %v841
    %v843 = vrot.slane %v842, 1
    %v844 = vadd.f32 %v842, %v843
    %v845 = vmul.f32 %v838, %v826
    %v846 = vmul.f32 %v844, %v826
    %v847 = vadd.f32 %v845, 1e-05
    %v848 = vadd.f32 %v846, 1e-05
    %v849 = vrsqrt.pop %v847
    %v850 = vrsqrt.pop %v848
    %v851 = vmul.f32 %v829, %v849
    %v852 = vmul.f32 %v830, %v850
    %v854 = vlaneseq
    %v855 = vshrl.u32 %v854, 7
    %v856 = vsub.s32 0, %v855
    %v857 = vrot.slane %v220, %v856
    %v858 = vlaneseq
    %v859 = vshrl.u32 %v858, 7
    %v860 = vsub.s32 1, %v859
    %v861 = vrot.slane %v220, %v860
    %v864 = vmul.f32 %v851, %v857
    %v865 = vmul.f32 %v852, %v861
    %v867 = vlaneseq
    %v868 = vshrl.u32 %v867, 7
    %v869 = vsub.s32 0, %v868
    %v870 = vrot.slane %v221, %v869
    %v871 = vlaneseq
    %v872 = vshrl.u32 %v871, 7
    %v873 = vsub.s32 1, %v872
    %v874 = vrot.slane %v221, %v873
    %v877 = vadd.f32 %v864, %v870
    %v878 = vadd.f32 %v865, %v874
    %v879 = vmax.f32 %v877, 0.0
    %v880 = vmax.f32 %v878, 0.0
    %v881 = vpack.c.bf16 %v879, %v879
    %v882 = vpack.c.bf16 %v880, %v880
    %v884 = vlaneseq
    %v885 = vshrl.u32 %v884, 7
    %v886 = vsub.s32 0, %v885
    %v887 = vrot.slane %v254, %v886
    %v921 = vunpack.c.l.b16 %v222
    %v922 = vunpack.c.l.b16 %v223
    %v923 = vunpack.c.l.b16 %v224
    %v924 = vunpack.c.l.b16 %v225
    %v925 = vunpack.c.l.b16 %v226
    %v926 = vunpack.c.l.b16 %v227
    %v927 = vunpack.c.l.b16 %v228
    %v928 = vunpack.c.l.b16 %v229
    %v929 = vunpack.c.l.b16 %v230
    %v930 = vunpack.c.l.b16 %v231
    %v931 = vunpack.c.l.b16 %v232
    %v932 = vunpack.c.l.b16 %v233
    %v933 = vunpack.c.l.b16 %v234
    %v934 = vunpack.c.l.b16 %v235
    %v935 = vunpack.c.l.b16 %v236
    %v936 = vunpack.c.l.b16 %v237
    %v937 = vunpack.c.l.b16 %v238
    %v938 = vunpack.c.l.b16 %v239
    %v939 = vunpack.c.l.b16 %v240
    %v940 = vunpack.c.l.b16 %v241
    %v941 = vunpack.c.l.b16 %v242
    %v942 = vunpack.c.l.b16 %v243
    %v943 = vunpack.c.l.b16 %v244
    %v944 = vunpack.c.l.b16 %v245
    %v945 = vunpack.c.l.b16 %v246
    %v946 = vunpack.c.l.b16 %v247
    %v947 = vunpack.c.l.b16 %v248
    %v948 = vunpack.c.l.b16 %v249
    %v949 = vunpack.c.l.b16 %v250
    %v950 = vunpack.c.l.b16 %v251
    %v951 = vunpack.c.l.b16 %v252
    %v952 = vunpack.c.l.b16 %v253
    %v953 = vpack.c.b16 %v922, %v921
    %v954 = vpack.c.b16 %v924, %v923
    %v955 = vpack.c.b16 %v926, %v925
    %v956 = vpack.c.b16 %v928, %v927
    %v957 = vpack.c.b16 %v930, %v929
    %v958 = vpack.c.b16 %v932, %v931
    %v959 = vpack.c.b16 %v934, %v933
    %v960 = vpack.c.b16 %v936, %v935
    %v961 = vpack.c.b16 %v938, %v937
    %v962 = vpack.c.b16 %v940, %v939
    %v963 = vpack.c.b16 %v942, %v941
    %v964 = vpack.c.b16 %v944, %v943
    %v965 = vpack.c.b16 %v946, %v945
    %v966 = vpack.c.b16 %v948, %v947
    %v967 = vpack.c.b16 %v950, %v949
    %v968 = vpack.c.b16 %v952, %v951
    %985 = vmatprep.subr.bf16.mxu0 0
    %986 = vmatpush1.bf16.msra.mxu0 %v953
    %987 = vmatprep.subr.bf16.mxu0 0
    %988 = vmatpush1.bf16.msra.mxu0 %v954
    %989 = vmatprep.subr.bf16.mxu0 0
    %990 = vmatpush1.bf16.msra.mxu0 %v955
    %991 = vmatprep.subr.bf16.mxu0 0
    %992 = vmatpush1.bf16.msra.mxu0 %v956
    %993 = vmatprep.subr.bf16.mxu0 0
    %994 = vmatpush1.bf16.msra.mxu0 %v957
    %995 = vmatprep.subr.bf16.mxu0 0
    %996 = vmatpush1.bf16.msra.mxu0 %v958
    %997 = vmatprep.subr.bf16.mxu0 0
    %998 = vmatpush1.bf16.msra.mxu0 %v959
    %999 = vmatprep.subr.bf16.mxu0 0
    %1000 = vmatpush1.bf16.msra.mxu0 %v960
    %1001 = vmatprep.subr.bf16.mxu0 0
    %1002 = vmatpush1.bf16.msra.mxu0 %v961
    %1003 = vmatprep.subr.bf16.mxu0 0
    %1004 = vmatpush1.bf16.msra.mxu0 %v962
    %1005 = vmatprep.subr.bf16.mxu0 0
    %1006 = vmatpush1.bf16.msra.mxu0 %v963
    %1007 = vmatprep.subr.bf16.mxu0 0
    %1008 = vmatpush1.bf16.msra.mxu0 %v964
    %1009 = vmatprep.subr.bf16.mxu0 0
    %1010 = vmatpush1.bf16.msra.mxu0 %v965
    %1011 = vmatprep.subr.bf16.mxu0 0
    %1012 = vmatpush1.bf16.msra.mxu0 %v966
    %1013 = vmatprep.subr.bf16.mxu0 0
    %1014 = vmatpush1.bf16.msra.mxu0 %v967
    %1015 = vmatprep.subr.bf16.mxu0 0
    %1016 = vmatpush1.bf16.msra.mxu0 %v968
    %1017 = vmatprep.mubr.bf16.mxu0 %v882
    %1018 = vmatmul.mubr.bf16.gmra.mrb[0].mxu0 %v881
    %v1019 = vpop.f32.mrb[0].mxu0
    %v1020 = vadd.f32 %v887, %v1019
    %v1021 = vpop.f32.mrb[0].mxu0
    %v1022 = vpop.f32.mrb[0].mxu0
    %v1023 = vpop.f32.mrb[0].mxu0
    %1024 = vdwg.mxu0
    %v1025 = vmul.f32 %v1020, %v1020
    %1026 = vadd.xlane.f32.xlu0 %v1025
    %v1027 = vpop.xlane.xlu0 %1026
    %v1028 = vmax.f32 %v1027, 1e-24
    %v1029 = vrsqrt.pop %v1028
    %v1030 = vmul.f32 %v1020, %v1029
    %v1031 = vld [vmem:[#allocation6] sm:$0xff]
    %v1032 = vld [vmem:[#allocation6 + $0x8] sm:$0xff]
    %v1033 = vld [vmem:[#allocation6 + $0x10] sm:$0xff]
    %v1034 = vld [vmem:[#allocation6 + $0x18] sm:$0xff]
    %v1035 = vld [vmem:[#allocation6 + $0x20] sm:$0xff]
    %v1036 = vld [vmem:[#allocation6 + $0x28] sm:$0xff]
    %v1037 = vpack.c.bf16 %v1031, %v1031
    %v1038 = vpack.c.bf16 %v1032, %v1032
    %v1039 = vpack.c.bf16 %v1033, %v1033
    %v1040 = vpack.c.bf16 %v1034, %v1034
    %v1041 = vpack.c.bf16 %v1035, %v1035
    %v1042 = vpack.c.bf16 %v1036, %v1036
    %1043 = vmatprep.subr.bf16.mxu0 0
    %1044 = vmatpush1.bf16.msra.mxu0 %v465
    %1045 = vmatprep.subr.bf16.mxu0 0
    %1046 = vmatpush1.bf16.msra.mxu0 %v466
    %1047 = vmatprep.subr.bf16.mxu0 0
    %1048 = vmatpush1.bf16.msra.mxu0 %v467
    %1049 = vmatprep.subr.bf16.mxu0 0
    %1050 = vmatpush1.bf16.msra.mxu0 %v468
    %1051 = vmatprep.subr.bf16.mxu0 0
    %1052 = vmatpush1.bf16.msra.mxu0 %v469
    %1053 = vmatprep.subr.bf16.mxu0 0
    %1054 = vmatpush1.bf16.msra.mxu0 %v470
    %1055 = vmatprep.subr.bf16.mxu0 0
    %1056 = vmatpush1.bf16.msra.mxu0 %v471
    %1057 = vmatprep.subr.bf16.mxu0 0
    %1058 = vmatpush1.bf16.msra.mxu0 %v472
    %1059 = vmatprep.subr.bf16.mxu0 0
    %1060 = vmatpush1.bf16.msra.mxu0 %v473
    %1061 = vmatprep.subr.bf16.mxu0 0
    %1062 = vmatpush1.bf16.msra.mxu0 %v474
    %1063 = vmatprep.subr.bf16.mxu0 0
    %1064 = vmatpush1.bf16.msra.mxu0 %v475
    %1065 = vmatprep.subr.bf16.mxu0 0
    %1066 = vmatpush1.bf16.msra.mxu0 %v476
    %1067 = vmatprep.subr.bf16.mxu0 0
    %1068 = vmatpush1.bf16.msra.mxu0 %v477
    %1069 = vmatprep.subr.bf16.mxu0 0
    %1070 = vmatpush1.bf16.msra.mxu0 %v478
    %1071 = vmatprep.subr.bf16.mxu0 0
    %1072 = vmatpush1.bf16.msra.mxu0 %v479
    %1073 = vmatprep.subr.bf16.mxu0 0
    %1074 = vmatpush1.bf16.msra.mxu0 %v480
    %1075 = vmatprep.mubr.bf16.mxu0 %v1038
    %1076 = vmatmul.mubr.bf16.gmra.mrb[0].mxu0 %v1037
    %v1077 = vpop.f32.mrb[0].mxu0
    %v1078 = vadd.f32 %v271, %v1077
    %v1079 = vpop.f32.mrb[0].mxu0
    %v1080 = vpop.f32.mrb[0].mxu0
    %v1081 = vpop.f32.mrb[0].mxu0
    %1082 = vdwg.mxu0
    %1083 = vmatprep.subr.bf16.mxu0 0
    %1084 = vmatpush1.bf16.msra.mxu0 %v481
    %1085 = vmatprep.subr.bf16.mxu0 0
    %1086 = vmatpush1.bf16.msra.mxu0 %v482
    %1087 = vmatprep.subr.bf16.mxu0 0
    %1088 = vmatpush1.bf16.msra.mxu0 %v483
    %1089 = vmatprep.subr.bf16.mxu0 0
    %1090 = vmatpush1.bf16.msra.mxu0 %v484
    %1091 = vmatprep.subr.bf16.mxu0 0
    %1092 = vmatpush1.bf16.msra.mxu0 %v485
    %1093 = vmatprep.subr.bf16.mxu0 0
    %1094 = vmatpush1.bf16.msra.mxu0 %v486
    %1095 = vmatprep.subr.bf16.mxu0 0
    %1096 = vmatpush1.bf16.msra.mxu0 %v487
    %1097 = vmatprep.subr.bf16.mxu0 0
    %1098 = vmatpush1.bf16.msra.mxu0 %v488
    %1099 = vmatprep.subr.bf16.mxu0 0
    %1100 = vmatpush1.bf16.msra.mxu0 %v489
    %1101 = vmatprep.subr.bf16.mxu0 0
    %1102 = vmatpush1.bf16.msra.mxu0 %v490
    %1103 = vmatprep.subr.bf16.mxu0 0
    %1104 = vmatpush1.bf16.msra.mxu0 %v491
    %1105 = vmatprep.subr.bf16.mxu0 0
    %1106 = vmatpush1.bf16.msra.mxu0 %v492
    %1107 = vmatprep.subr.bf16.mxu0 0
    %1108 = vmatpush1.bf16.msra.mxu0 %v493
    %1109 = vmatprep.subr.bf16.mxu0 0
    %1110 = vmatpush1.bf16.msra.mxu0 %v494
    %1111 = vmatprep.subr.bf16.mxu0 0
    %1112 = vmatpush1.bf16.msra.mxu0 %v495
    %1113 = vmatprep.subr.bf16.mxu0 0
    %1114 = vmatpush1.bf16.msra.mxu0 %v496
    %1115 = vmatprep.mubr.bf16.mxu0 %v1040
    %1116 = vmatmul.mubr.bf16.gmra.mrb[0].mxu0 %v1039
    %v1117 = vpop.f32.mrb[0].mxu0
    %v1118 = vadd.f32 %v1078, %v1117
    %v1119 = vpop.f32.mrb[0].mxu0
    %v1120 = vpop.f32.mrb[0].mxu0
    %v1121 = vpop.f32.mrb[0].mxu0
    %1122 = vdwg.mxu0
    %1123 = vmatprep.subr.bf16.mxu0 0
    %1124 = vmatpush1.bf16.msra.mxu0 %v497
    %1125 = vmatprep.subr.bf16.mxu0 0
    %1126 = vmatpush1.bf16.msra.mxu0 %v498
    %1127 = vmatprep.subr.bf16.mxu0 0
    %1128 = vmatpush1.bf16.msra.mxu0 %v499
    %1129 = vmatprep.subr.bf16.mxu0 0
    %1130 = vmatpush1.bf16.msra.mxu0 %v500
    %1131 = vmatprep.subr.bf16.mxu0 0
    %1132 = vmatpush1.bf16.msra.mxu0 %v501
    %1133 = vmatprep.subr.bf16.mxu0 0
    %1134 = vmatpush1.bf16.msra.mxu0 %v502
    %1135 = vmatprep.subr.bf16.mxu0 0
    %1136 = vmatpush1.bf16.msra.mxu0 %v503
    %1137 = vmatprep.subr.bf16.mxu0 0
    %1138 = vmatpush1.bf16.msra.mxu0 %v504
    %1139 = vmatprep.subr.bf16.mxu0 0
    %1140 = vmatpush1.bf16.msra.mxu0 %v505
    %1141 = vmatprep.subr.bf16.mxu0 0
    %1142 = vmatpush1.bf16.msra.mxu0 %v506
    %1143 = vmatprep.subr.bf16.mxu0 0
    %1144 = vmatpush1.bf16.msra.mxu0 %v507
    %1145 = vmatprep.subr.bf16.mxu0 0
    %1146 = vmatpush1.bf16.msra.mxu0 %v508
    %1147 = vmatprep.subr.bf16.mxu0 0
    %1148 = vmatpush1.bf16.msra.mxu0 %v509
    %1149 = vmatprep.subr.bf16.mxu0 0
    %1150 = vmatpush1.bf16.msra.mxu0 %v510
    %1151 = vmatprep.subr.bf16.mxu0 0
    %1152 = vmatpush1.bf16.msra.mxu0 %v511
    %1153 = vmatprep.subr.bf16.mxu0 0
    %1154 = vmatpush1.bf16.msra.mxu0 %v512
    %1155 = vmatprep.mubr.bf16.mxu0 %v1042
    %1156 = vmatmul.mubr.bf16.gmra.mrb[0].mxu0 %v1041
    %v1157 = vpop.f32.mrb[0].mxu0
    %v1158 = vadd.f32 %v1118, %v1157
    %v1159 = vpop.f32.mrb[0].mxu0
    %v1160 = vpop.f32.mrb[0].mxu0
    %v1161 = vpop.f32.mrb[0].mxu0
    %1162 = vdwg.mxu0
    %v1163 = vpack.c.bf16 %v1158, %v1158
    %1164 = vmatprep.subr.bf16.mxu0 %v742
    %1165 = vmatpush1.bf16.msra.mxu0 %v741
    %1166 = vmatprep.subr.bf16.mxu0 %v744
    %1167 = vmatpush1.bf16.msra.mxu0 %v743
    %1168 = vmatprep.subr.bf16.mxu0 %v746
    %1169 = vmatpush1.bf16.msra.mxu0 %v745
    %1170 = vmatprep.subr.bf16.mxu0 %v748
    %1171 = vmatpush1.bf16.msra.mxu0 %v747
    %1172 = vmatprep.subr.bf16.mxu0 %v750
    %1173 = vmatpush1.bf16.msra.mxu0 %v749
    %1174 = vmatprep.subr.bf16.mxu0 %v752
    %1175 = vmatpush1.bf16.msra.mxu0 %v751
    %1176 = vmatprep.subr.bf16.mxu0 %v754
    %1177 = vmatpush1.bf16.msra.mxu0 %v753
    %1178 = vmatprep.subr.bf16.mxu0 %v756
    %1179 = vmatpush1.bf16.msra.mxu0 %v755
    %1180 = vmatprep.subr.bf16.mxu0 0
    %1181 = vmatpush1.bf16.msra.mxu0 0
    %1182 = vmatprep.subr.bf16.mxu0 0
    %1183 = vmatpush1.bf16.msra.mxu0 0
    %1184 = vmatprep.subr.bf16.mxu0 0
    %1185 = vmatpush1.bf16.msra.mxu0 0
    %1186 = vmatprep.subr.bf16.mxu0 0
    %1187 = vmatpush1.bf16.msra.mxu0 0
    %1188 = vmatprep.subr.bf16.mxu0 0
    %1189 = vmatpush1.bf16.msra.mxu0 0
    %1190 = vmatprep.subr.bf16.mxu0 0
    %1191 = vmatpush1.bf16.msra.mxu0 0
    %1192 = vmatprep.subr.bf16.mxu0 0
    %1193 = vmatpush1.bf16.msra.mxu0 0
    %1194 = vmatprep.subr.bf16.mxu0 0
    %1195 = vmatpush1.bf16.msra.mxu0 0
    %1196 = vmatprep.mubr.bf16.mxu0 0
    %1197 = vmatmul.mubr.bf16.gmra.mrb[0].mxu0 %v1163
    %v1198 = vpop.f32.mrb[0].mxu0
    %v1199 = vadd.f32 %v686, %v1198
    %v1200 = vpop.f32.mrb[0].mxu0
    %v1201 = vadd.f32 %v690, %v1200
    %v1202 = vpop.f32.mrb[0].mxu0
    %v1203 = vpop.f32.mrb[0].mxu0
    %1204 = vdwg.mxu0
    %v1205 = vrot.slane %v1199, 4
    %v1206 = vadd.f32 %v1199, %v1205
    %v1207 = vrot.slane %v1206, 2
    %v1208 = vadd.f32 %v1206, %v1207
    %v1209 = vrot.slane %v1208, 1
    %v1210 = vadd.f32 %v1208, %v1209
    %v1211 = vrot.slane %v1201, 4
    %v1212 = vadd.f32 %v1201, %v1211
    %v1213 = vrot.slane %v1212, 2
    %v1214 = vadd.f32 %v1212, %v1213
    %v1215 = vrot.slane %v1214, 1
    %v1216 = vadd.f32 %v1214, %v1215
    %v1217 = vmul.f32 %v1210, %v826
    %v1218 = vmul.f32 %v1216, %v826
    %v1219 = vsub.f32 %v1199, %v1217
    %v1220 = vsub.f32 %v1201, %v1218
    %v1221 = vmul.f32 %v1219, %v1219
    %v1222 = vmul.f32 %v1220, %v1220
    %v1223 = vrot.slane %v1221, 4
    %v1224 = vadd.f32 %v1221, %v1223
    %v1225 = vrot.slane %v1224, 2
    %v1226 = vadd.f32 %v1224, %v1225
    %v1227 = vrot.slane %v1226, 1
    %v1228 = vadd.f32 %v1226, %v1227
    %v1229 = vrot.slane %v1222, 4
    %v1230 = vadd.f32 %v1222, %v1229
    %v1231 = vrot.slane %v1230, 2
    %v1232 = vadd.f32 %v1230, %v1231
    %v1233 = vrot.slane %v1232, 1
    %v1234 = vadd.f32 %v1232, %v1233
    %v1235 = vmul.f32 %v1228, %v826
    %v1236 = vmul.f32 %v1234, %v826
    %v1237 = vadd.f32 %v1235, 1e-05
    %v1238 = vadd.f32 %v1236, 1e-05
    %v1239 = vrsqrt.pop %v1237
    %v1240 = vrsqrt.pop %v1238
    %v1241 = vmul.f32 %v1219, %v1239
    %v1242 = vmul.f32 %v1220, %v1240
    %v1243 = vmul.f32 %v1241, %v857
    %v1244 = vmul.f32 %v1242, %v861
    %v1245 = vadd.f32 %v1243, %v870
    %v1246 = vadd.f32 %v1244, %v874
    %v1247 = vmax.f32 %v1245, 0.0
    %v1248 = vmax.f32 %v1246, 0.0
    %v1249 = vpack.c.bf16 %v1247, %v1247
    %v1250 = vpack.c.bf16 %v1248, %v1248
    %1251 = vmatprep.subr.bf16.mxu0 0
    %1252 = vmatpush1.bf16.msra.mxu0 %v953
    %1253 = vmatprep.subr.bf16.mxu0 0
    %1254 = vmatpush1.bf16.msra.mxu0 %v954
    %1255 = vmatprep.subr.bf16.mxu0 0
    %1256 = vmatpush1.bf16.msra.mxu0 %v955
    %1257 = vmatprep.subr.bf16.mxu0 0
    %1258 = vmatpush1.bf16.msra.mxu0 %v956
    %1259 = vmatprep.subr.bf16.mxu0 0
    %1260 = vmatpush1.bf16.msra.mxu0 %v957
    %1261 = vmatprep.subr.bf16.mxu0 0
    %1262 = vmatpush1.bf16.msra.mxu0 %v958
    %1263 = vmatprep.subr.bf16.mxu0 0
    %1264 = vmatpush1.bf16.msra.mxu0 %v959
    %1265 = vmatprep.subr.bf16.mxu0 0
    %1266 = vmatpush1.bf16.msra.mxu0 %v960
    %1267 = vmatprep.subr.bf16.mxu0 0
    %1268 = vmatpush1.bf16.msra.mxu0 %v961
    %1269 = vmatprep.subr.bf16.mxu0 0
    %1270 = vmatpush1.bf16.msra.mxu0 %v962
    %1271 = vmatprep.subr.bf16.mxu0 0
    %1272 = vmatpush1.bf16.msra.mxu0 %v963
    %1273 = vmatprep.subr.bf16.mxu0 0
    %1274 = vmatpush1.bf16.msra.mxu0 %v964
    %1275 = vmatprep.subr.bf16.mxu0 0
    %1276 = vmatpush1.bf16.msra.mxu0 %v965
    %1277 = vmatprep.subr.bf16.mxu0 0
    %1278 = vmatpush1.bf16.msra.mxu0 %v966
    %1279 = vmatprep.subr.bf16.mxu0 0
    %1280 = vmatpush1.bf16.msra.mxu0 %v967
    %1281 = vmatprep.subr.bf16.mxu0 0
    %1282 = vmatpush1.bf16.msra.mxu0 %v968
    %1283 = vmatprep.mubr.bf16.mxu0 %v1250
    %1284 = vmatmul.mubr.bf16.gmra.mrb[0].mxu0 %v1249
    %v1285 = vpop.f32.mrb[0].mxu0
    %v1286 = vadd.f32 %v887, %v1285
    %v1287 = vpop.f32.mrb[0].mxu0
    %v1288 = vpop.f32.mrb[0].mxu0
    %v1289 = vpop.f32.mrb[0].mxu0
    %1290 = vdwg.mxu0
    %v1291 = vmul.f32 %v1286, %v1286
    %1292 = vadd.xlane.f32.xlu0 %v1291
    %v1293 = vpop.xlane.xlu0 %1292
    %v1294 = vmax.f32 %v1293, 1e-24
    %v1295 = vrsqrt.pop %v1294
    %v1296 = vmul.f32 %v1286, %v1295
    %1297 = vst [vmem:[#allocation13] sm:$0xff] %v676
    %1298 = vst [vmem:[#allocation13 + $0x8] sm:$0xff] %v1158
    %1299 = vst [vmem:[#allocation12] sm:$0xff] %v1030
    %1300 = vst [vmem:[#allocation12 + $0x8] sm:$0xff] %v1296
    %v1301 = vld [vmem:[#allocation12] sm:$0xff]
    %v1302 = vld [vmem:[#allocation12 + $0x8] sm:$0xff]
    %v1303 = vpack.c.bf16 %v1302, %v1301
    %1304 = vmatprep.subr.bf16.mxu0 0
    %1305 = vmatpush1.bf16.xpose.msra.mxu0 %v1303
    %1306 = vmatprep.subr.bf16.mxu0 0
    %1307 = vmatpush1.bf16.xpose.msra.mxu0 0
    %1308 = vmatprep.subr.bf16.mxu0 0
    %1309 = vmatpush1.bf16.xpose.msra.mxu0 0
    %1310 = vmatprep.subr.bf16.mxu0 0
    %1311 = vmatpush1.bf16.xpose.msra.mxu0 0
    %1312 = vmatprep.subr.bf16.mxu0 0
    %1313 = vmatpush1.bf16.xpose.msra.mxu0 0
    %1314 = vmatprep.subr.bf16.mxu0 0
    %1315 = vmatpush1.bf16.xpose.msra.mxu0 0
    %1316 = vmatprep.subr.bf16.mxu0 0
    %1317 = vmatpush1.bf16.xpose.msra.mxu0 0
    %1318 = vmatprep.subr.bf16.mxu0 0
    %1319 = vmatpush1.bf16.xpose.msra.mxu0 0
    %1320 = vmatprep.subr.bf16.mxu0 0
    %1321 = vmatpush1.bf16.xpose.msra.mxu0 0
    %1322 = vmatprep.subr.bf16.mxu0 0
    %1323 = vmatpush1.bf16.xpose.msra.mxu0 0
    %1324 = vmatprep.subr.bf16.mxu0 0
    %1325 = vmatpush1.bf16.xpose.msra.mxu0 0
    %1326 = vmatprep.subr.bf16.mxu0 0
    %1327 = vmatpush1.bf16.xpose.msra.mxu0 0
    %1328 = vmatprep.subr.bf16.mxu0 0
    %1329 = vmatpush1.bf16.xpose.msra.mxu0 0
    %1330 = vmatprep.subr.bf16.mxu0 0
    %1331 = vmatpush1.bf16.xpose.msra.mxu0 0
    %1332 = vmatprep.subr.bf16.mxu0 0
    %1333 = vmatpush1.bf16.xpose.msra.mxu0 0
    %1334 = vmatprep.subr.bf16.mxu0 0
    %1335 = vmatpush1.bf16.xpose.msra.mxu0 0
    %1336 = vmatprep.mubr.bf16.mxu0 0
    %1337 = vmatmul.mubr.bf16.gmra.mrb[0].mxu0 %v1303
    %v1338 = vpop.f32.mrb[0].mxu0
    %v1339 = vadd.f32 0.0, %v1338
    %v1340 = vpop.f32.mrb[0].mxu0
    %v1341 = vpop.f32.mrb[0].mxu0
    %v1342 = vadd.f32 0.0, %v1341
    %v1343 = vpop.f32.mrb[0].mxu0
    %1344 = vdwg.mxu0
    %v1345 = vmul.f32 %v1339, 14.285714
    %v1346 = vmul.f32 %v1342, 14.285714
    %v1347 = vlaneseq
    %v1348 = vshrl.u32 %v1347, 7
    %v1349 = vadd.s32 %v1348, 8
    %v1350 = vlaneseq
    %v1351 = vand.u32 %v1350, 127
    %v1352 = vxor.u32 %v1348, 1
    %v1353 = vxor.u32 %v1349, 1
    %vm1354 = vcmp.eq.s32.totalorder %v1351, %v1352
    %vm1355 = vcmp.eq.s32.totalorder %v1351, %v1353
    %v1356 = vsel %vm1354, 1.0, 0.0
    %v1357 = vsel %vm1355, 1.0, 0.0
    %vm1358 = vcmask 130048
    %v1359 = vsel %vm1358, %v1345, -inf
    %1360 = vmax.xlane.f32.xlu0 %v1359
    %v1361 = vpop.xlane.xlu0 %1360
    %v1362 = vsel %vm1358, %v1346, -inf
    %1363 = vmax.xlane.f32.xlu0 %v1362
    %v1364 = vpop.xlane.xlu0 %1363
    %v1365 = vsub.f32 %v1345, %v1361
    %v1366 = vsub.f32 %v1346, %v1364
    %v1367 = vmul.f32 %v1365, 1.442695
    %v1368 = vpow.pop %v1367
    %v1369 = vmul.f32 %v1366, 1.442695
    %v1370 = vpow.pop %v1369
    %v1371 = vsel %vm1358, %v1368, 0.0
    %1372 = vadd.xlane.f32.xlu0 %v1371
    %v1373 = vpop.xlane.xlu0 %1372
    %v1374 = vsel %vm1358, %v1370, 0.0
    %1375 = vadd.xlane.f32.xlu0 %v1374
    %v1376 = vpop.xlane.xlu0 %1375
    %v1377 = vlog2.pop %v1373
    %v1378 = vmul.f32 %v1377, 0.6931472
    %v1379 = vlog2.pop %v1376
    %v1380 = vmul.f32 %v1379, 0.6931472
    %v1381 = vsub.f32 %v1365, %v1378
    %v1382 = vsub.f32 %v1366, %v1380
    %v1383 = vmul.f32 %v1356, %v1381
    %v1384 = vmul.f32 %v1357, %v1382
    %v1385 = vsel %vm1358, %v1383, 0.0
    %1386 = vadd.xlane.f32.xlu0 %v1385
    %v1387 = vpop.xlane.xlu0 %1386
    %v1388 = vsel %vm1358, %v1384, 0.0
    %1389 = vadd.xlane.f32.xlu0 %v1388
    %v1390 = vpop.xlane.xlu0 %1389
    %v1391 = vsel %vm1358, %v1356, 0.0
    %1392 = vadd.xlane.f32.xlu0 %v1391
    %v1393 = vpop.xlane.xlu0 %1392
    %v1394 = vsel %vm1358, %v1357, 0.0
    %1395 = vadd.xlane.f32.xlu0 %v1394
    %v1396 = vpop.xlane.xlu0 %1395
    %v1397 = vrcp.pop %v1393
    %v1398 = vmul.f32 %v1387, %v1397
    %v1399 = vrcp.pop %v1396
    %v1400 = vmul.f32 %v1390, %v1399
    %vm1401 = vcmask 7168
    %v1402 = vsel %vm1401, %v1398, 0.0
    %v1403 = vsel %vm1401, %v1400, 0.0
    %v1404 = vadd.f32 %v1402, %v1403
    %1405 = vadd.xlane.f32.xlu0 %v1404
    %v1406 = vpop.xlane.xlu0 %1405
    %v1407 = vrot.slane %v1406, 4
    %v1408 = vadd.f32 %v1406, %v1407
    %v1409 = vrot.slane %v1408, 2
    %v1410 = vadd.f32 %v1408, %v1409
    %v1411 = vrot.slane %v1410, 1
    %v1412 = vadd.f32 %v1410, %v1411
    %s1413 = vtos %v1412
    %s1414 = ssub.f32 0.0, %s1413
    %v1415 = vrcp.pop 16.0
    %s1416 = vtos %v1415
    %s1417 = smul.f32 %s1414, %s1416
    %s1418 = scalar_lea.smem [#allocation15], 0
    %1419 = sst [smem:[%s1418]] %s1417
    // Predicated region
    $region62: #{tpu_custom_call.1} parent=1 // pred_check
      _
    $region63: #{tpu_custom_call.1} parent=1 // pred_check_branch
      %1421 = sbr.rel (0) target = $region65
    $region64: #{tpu_custom_call.1} parent=1 // pred_region
      %s1423 = ssub.s32 256, 256
      %1424 = vsyncadd [#allocation4], %s1423
      %s1425 = sshll.u32 [#allocation12], 4
      %s1426 = int_to_ptr.vmem [resolvable:$true] %s1425
      %1431 = dma.vmem_to_hbm [thread:$0]  %s1426, 256, %s10, [#allocation4], 128, 128, 8
    $region65: #{tpu_custom_call.1} parent=1 // pred_fallthru
      _
    // Predicated region
    $region66: #{tpu_custom_call.1} parent=1 // pred_check
      _
    $region67: #{tpu_custom_call.1} parent=1 // pred_check_branch
      %1433 = sbr.rel (0) target = $region69
    $region68: #{tpu_custom_call.1} parent=1 // pred_region
      %s1435 = ssub.s32 256, 256
      %1436 = vsyncadd [#allocation14], %s1435
      %s1437 = sshll.u32 [#allocation13], 4
      %s1438 = int_to_ptr.vmem [resolvable:$true] %s1437
      %1443 = dma.vmem_to_hbm [thread:$0]  %s1438, 256, %s11, [#allocation14], 128, 128, 8
    $region69: #{tpu_custom_call.1} parent=1 // pred_fallthru
      _
    // Predicated region
    $region70: #{tpu_custom_call.1} parent=1 // pred_check
      _
    $region71: #{tpu_custom_call.1} parent=1 // pred_check_branch
      %1445 = sbr.rel (0) target = $region73
    $region72: #{tpu_custom_call.1} parent=1 // pred_region
      %s1447 = ssub.s32 16, 16
      %1448 = vsyncadd [#allocation5], %s1447
      %1451 = dma.smem_to_hbm [#allocation15], 16, %s12, [#allocation5]
    $region73: #{tpu_custom_call.1} parent=1 // pred_fallthru
      _
    // Predicated region
    $region74: #{tpu_custom_call.1} parent=1 // pred_check
      _
    $region75: #{tpu_custom_call.1} parent=1 // pred_check_branch
      %1453 = sbr.rel (0) target = $region77
    $region76: #{tpu_custom_call.1} parent=1 // pred_region
      %1454 = dma.done [#allocation4], 256
    $region77: #{tpu_custom_call.1} parent=1 // pred_fallthru
      _
    // Predicated region
    $region78: #{tpu_custom_call.1} parent=1 // pred_check
      _
    $region79: #{tpu_custom_call.1} parent=1 // pred_check_branch
      %1456 = sbr.rel (0) target = $region81
    $region80: #{tpu_custom_call.1} parent=1 // pred_region
      %1457 = dma.done [#allocation14], 256
    $region81: #{tpu_custom_call.1} parent=1 // pred_fallthru
      _
    // Predicated region
    $region82: #{tpu_custom_call.1} parent=1 // pred_check
      _
    $region83: #{tpu_custom_call.1} parent=1 // pred_check_branch
      %1459 = sbr.rel (0) target = $region85
    $region84: #{tpu_custom_call.1} parent=1 // pred_region
      %1460 = dma.done [#allocation5], 16
    $region85: #{tpu_custom_call.1} parent=1 // pred_fallthru
      _
    %1461 = sfence
    %1462 = vsyncpa [#allocation3], 1
    %1463 = vsyncpa [#allocation7], 1
    %1464 = vsyncpa [#allocation10], 1
    %1465 = vsyncpa [#allocation4], 1
    %1466 = vsyncpa [#allocation14], 1
    %1467 = vsyncpa [#allocation5], 1

</llo_original>
